<compile_context>
chip_gen: v6e
topology: v6e:2x2x1
jax: 0.10.0
libtpu: 0.0.40
codegen_flags: <defaults>
</compile_context>

<pallas_src>
import functools

import jax
import jax.numpy as jnp
from jax.experimental import pallas as pl
from jax.experimental.pallas import tpu as pltpu


# ----------------------------------------------------------------------------
# Weight packing (host / param time -- zero in-kernel relayout work)
#
# Fused gate-column layout (width 8H):
#     [ i_f | i_b | f_f | f_b | o_f | o_b | g_f | g_b ]
# ----------------------------------------------------------------------------
def _gate_cols(mat4, hidden, direction):
    """Scatter a per-direction (R, 4H) gate matrix (PyTorch order [i,f,g,o])
    into the fused (R, 8H) column layout; zeros in the other direction's cols."""
    H = hidden
    i = mat4[:, 0:H]
    f = mat4[:, H:2 * H]
    g = mat4[:, 2 * H:3 * H]
    o = mat4[:, 3 * H:4 * H]
    z = jnp.zeros_like(i)
    if direction == 0:   # forward
        blocks = [i, z, f, z, o, z, g, z]
    else:                # backward
        blocks = [z, i, z, f, z, o, z, g]
    return jnp.concatenate(blocks, axis=1)


def pack_kernel_params(raw_layers, hidden):
    """Pre-pack weights into the exact in-kernel layout."""
    H = hidden
    packed = []
    for l, (wih_f, whh_f, b_f, wih_b, whh_b, b_b) in enumerate(raw_layers):
        if l == 0:
            # layer-0 input is the doubled slab [x(t) | x(T-1-t)]  -> (2E, 8H)
            wih = jnp.concatenate([_gate_cols(wih_f, H, 0),
                                   _gate_cols(wih_b, H, 1)], axis=0)
        else:
            # deeper-layer input block (per time block t) is laid out as
            #   [ y_f(t) | y_b(T-1-t) | y_f(T-1-t) | y_b(t) ]          -> (4H, 8H)
            wih = jnp.concatenate([
                _gate_cols(wih_f[0:H], H, 0),        # y_f(t)      -> fwd gates
                _gate_cols(wih_b[H:2 * H], H, 1),    # y_b(T-1-t)  -> bwd gates
                _gate_cols(wih_b[0:H], H, 1),        # y_f(T-1-t)  -> bwd gates
                _gate_cols(wih_f[H:2 * H], H, 0),    # y_b(t)      -> fwd gates
            ], axis=0)
        # Block-structured recurrent weight: ONE (BB,2H)@(2H,8H) matmul/step.
        whh = jnp.concatenate([_gate_cols(whh_f, H, 0),
                               _gate_cols(whh_b, H, 1)], axis=0)      # (2H, 8H)
        bias = _gate_cols(b_f, H, 0) + _gate_cols(b_b, H, 1)          # (1, 8H)
        packed.append((wih, whh, bias))
    return packed


# ----------------------------------------------------------------------------
# Fused kernel: all layers, both directions, both towers, + similarity head.
# ----------------------------------------------------------------------------
def _make_siamese_kernel(num_layers, T, BB, B, H):
    """BB = padded 2*B (q rows, a rows, zero padding) -- multiple of 8."""
    H2, H4, H6, H8 = 2 * H, 4 * H, 6 * H, 8 * H
    n_w = 3 * num_layers     # (wih, whh, bias) per layer

    def kernel(*args):
        x_ref = args[0]                        # (T*BB, 2E)  [x(t) | x(T-1-t)]
        w_refs = args[1:1 + n_w]               # wih, whh (2H,8H), bias (1,8H)
        fcw_ref = args[1 + n_w]                # (2, 2) == fc.weight^T
        fcb_ref = args[2 + n_w]                # (1, 2)
        out_ref = args[3 + n_w]                # (8, 128) lane-dense out block
        gin_sc = args[4 + n_w]                 # (T*BB, 8H) staged projection
        y_sc = args[5 + n_w]                   # (T*BB, 4H) inter-layer slab

        h = None
        for layer in range(num_layers):
            wih = w_refs[3 * layer][...]       # pre-packed, no in-kernel slicing
            whh = w_refs[3 * layer + 1][...]   # (2H, 8H) block-structured
            bias = w_refs[3 * layer + 2][...]  # (1, 8H)

            x_in = x_ref[...] if layer == 0 else y_sc[...]

            # Whole-sequence, both-direction input projection: ONE MXU matmul,
            # staged to VMEM scratch (bounds vreg pressure across the unroll).
            gin_sc[...] = (jnp.dot(x_in, wih, preferred_element_type=jnp.float32)
                           + bias)

            h = jnp.zeros((BB, H2), jnp.float32)   # [h_fwd | h_bwd]
            c = jnp.zeros((BB, H2), jnp.float32)   # [c_fwd | c_bwd]
            write_y = layer < num_layers - 1

            # Serial recurrence; static unroll (T is small).  For long T use
            # lax.fori_loop(..., unroll=k) with (h, c) as carry.
            for t in range(T):
                # ONE contiguous (BB, 8H) load + ONE fused recurrent matmul.
                g = (gin_sc[t * BB:(t + 1) * BB, :]
                     + jnp.dot(h, whh, preferred_element_type=jnp.float32))

                sig = jax.nn.sigmoid(g[:, 0:H6])       # [i_f i_b f_f f_b o_f o_b]
                gt = jnp.tanh(g[:, H6:H8])             # [g_f g_b]
                c = sig[:, H2:H4] * c + sig[:, 0:H2] * gt
                h = sig[:, H4:H6] * jnp.tanh(c)

                if write_y:                    # feed next layer (fwd + rev copy)
                    tr = T - 1 - t
                    y_sc[t * BB:(t + 1) * BB, 0:H2] = h
                    y_sc[tr * BB:(tr + 1) * BB, H2:H4] = h

        # h[:, H:2H] == final hidden of the backward direction of the last
        # layer == h_n[-1] in the PyTorch module.
        hq = h[0:B, H:H2]
        ha = h[B:2 * B, H:H2]
        eps = 1e-6
        dot = jnp.sum(hq * ha, axis=-1, keepdims=True)
        nq = jnp.sqrt(jnp.sum(hq * hq, axis=-1, keepdims=True))
        na = jnp.sqrt(jnp.sum(ha * ha, axis=-1, keepdims=True))
        csim = jnp.abs(dot / jnp.maximum(nq * na, eps))                     # (B,1)
        res = jnp.exp(-jnp.sum(jnp.abs(hq - ha), axis=-1, keepdims=True))   # (B,1)

        # encoding = stack([c, res]); logits = encoding @ W^T + b
        w = fcw_ref[...]
        logits = csim * w[0:1, :] + res * w[1:2, :] + fcb_ref[...]          # (B,2)
        m = jnp.max(logits, axis=-1, keepdims=True)
        e = jnp.exp(logits - m)
        probs = e / jnp.sum(e, axis=-1, keepdims=True)

        out_ref[...] = jnp.zeros(out_ref.shape, out_ref.dtype)   # lane-dense block
        out_ref[0:B, 0:2] = probs

    return kernel


def siamese_lstm_forward(q_idx, a_idx, embedding, packed_layers, fc_w_t, fc_b,
                         num_layers, hidden):
    B, T = q_idx.shape
    E = embedding.shape[1]
    H = hidden
    BB = ((2 * B + 7) // 8) * 8        # pad stacked batch to full sublane tile

    # Embedding lookup (XLA glue) + pack both towers along batch, time-major.
    q_emb = jnp.take(embedding, q_idx, axis=0)              # (B, T, E)
    a_emb = jnp.take(embedding, a_idx, axis=0)
    x = jnp.concatenate([q_emb, a_emb], axis=0)             # (2B, T, E)
    if BB > 2 * B:
        x = jnp.concatenate(
            [x, jnp.zeros((BB - 2 * B, T, E), x.dtype)], axis=0)
    x = jnp.transpose(x, (1, 0, 2))                         # (T, BB, E)
    # Doubled input: block t holds [x(t) | x(T-1-t)] so one matmul produces
    # time-aligned fwd and bwd gate pre-activations.
    x2 = jnp.concatenate([x, x[::-1]], axis=-1).reshape(T * BB, 2 * E)

    flat_w = [w for lw in packed_layers for w in lw]
    n_in = 1 + len(flat_w) + 2

    kernel = _make_siamese_kernel(num_layers, T, BB, B, H)
    vmem = pl.BlockSpec(memory_space=pltpu.MemorySpace.VMEM)
    out = pl.pallas_call(
        kernel,
        out_shape=jax.ShapeDtypeStruct((8, 128), jnp.float32),   # lane-dense
        in_specs=[vmem] * n_in,
        out_specs=vmem,
        scratch_shapes=[
            pltpu.VMEM((T * BB, 8 * H), jnp.float32),   # staged gate projection
            pltpu.VMEM((T * BB, 4 * H), jnp.float32),   # inter-layer activations
        ],
        compiler_params=pltpu.CompilerParams(vmem_limit_bytes=64 * 1024 * 1024),
    )(x2, *flat_w, fc_w_t, fc_b)
    return out[:B, :2]


# ----------------------------------------------------------------------------
# Pure-JAX reference (for in-script numerical verification)
# ----------------------------------------------------------------------------
def reference_forward(q_idx, a_idx, embedding, raw_layers, fc_w_t, fc_b,
                      num_layers, hidden):
    H = hidden

    def lstm_dir(seq, wih, whh, b):        # wih (In,4H), whh (H,4H), b (1,4H)
        Bsz = seq.shape[1]

        def step(carry, x_t):
            h, c = carry
            g = x_t @ wih + h @ whh + b
            i = jax.nn.sigmoid(g[:, 0:H])
            f = jax.nn.sigmoid(g[:, H:2 * H])
            gg = jnp.tanh(g[:, 2 * H:3 * H])
            o = jax.nn.sigmoid(g[:, 3 * H:4 * H])
            c = f * c + i * gg
            h = o * jnp.tanh(c)
            return (h, c), h

        init = (jnp.zeros((Bsz, H), jnp.float32), jnp.zeros((Bsz, H), jnp.float32))
        (h_last, _), ys = jax.lax.scan(step, init, seq)
        return ys, h_last

    def tower(idx):
        x = jnp.take(embedding, idx, axis=0)          # (B, T, E)
        seq = jnp.transpose(x, (1, 0, 2))             # (T, B, E)
        h_last_b = None
        for (wih_f, whh_f, b_f, wih_b, whh_b, b_b) in raw_layers:
            ys_f, _ = lstm_dir(seq, wih_f, whh_f, b_f)
            ys_b_rev, h_last_b = lstm_dir(seq[::-1], wih_b, whh_b, b_b)
            seq = jnp.concatenate([ys_f, ys_b_rev[::-1]], axis=-1)
        return h_last_b

    hq = tower(q_idx)
    ha = tower(a_idx)
    dot = jnp.sum(hq * ha, axis=1)
    nq = jnp.sqrt(jnp.sum(hq * hq, axis=1))
    na = jnp.sqrt(jnp.sum(ha * ha, axis=1))
    c = jnp.abs(dot / jnp.maximum(nq * na, 1e-6))
    res = jnp.exp(-jnp.sum(jnp.abs(hq - ha), axis=1))
    enc = jnp.stack([c, res], axis=1)
    logits = enc @ fc_w_t + fc_b
    return jax.nn.softmax(logits, axis=-1)


# ----------------------------------------------------------------------------
# Deterministic parameter construction (nn.LSTM / nn.Linear shapes)
# ----------------------------------------------------------------------------
def make_params(key, vocab, emb_size, hidden, num_layers):
    k = 1.0 / jnp.sqrt(jnp.float32(hidden))
    keys = iter(jax.random.split(key, 8 * num_layers + 3))

    embedding = jax.random.normal(next(keys), (vocab, emb_size), jnp.float32)

    raw_layers = []
    for l in range(num_layers):
        in_sz = emb_size if l == 0 else 2 * hidden
        per_dir = []
        for _d in range(2):  # forward, backward
            w_ih = jax.random.uniform(next(keys), (4 * hidden, in_sz), jnp.float32, -k, k)
            w_hh = jax.random.uniform(next(keys), (4 * hidden, hidden), jnp.float32, -k, k)
            b_ih = jax.random.uniform(next(keys), (4 * hidden,), jnp.float32, -k, k)
            b_hh = jax.random.uniform(next(keys), (4 * hidden,), jnp.float32, -k, k)
            per_dir.append((w_ih.T,                      # (in_sz, 4H), gates [i,f,g,o]
                            w_hh.T,                      # (H, 4H)
                            (b_ih + b_hh).reshape(1, 4 * hidden)))
        (wih_f, whh_f, b_f), (wih_b, whh_b, b_b) = per_dir
        raw_layers.append((wih_f, whh_f, b_f, wih_b, whh_b, b_b))

    fc_w = jax.random.uniform(next(keys), (2, 2), jnp.float32, -0.5, 0.5)
    fc_b = jax.random.uniform(next(keys), (2,), jnp.float32, -0.5, 0.5)
    return embedding, raw_layers, fc_w.T, fc_b.reshape(1, 2)


if __name__ == "__main__":
    B, T = 2, 8
    VOCAB, EMB, HIDDEN, LAYERS = 50, 32, 32, 2

    key = jax.random.PRNGKey(0)
    kq, ka, kp = jax.random.split(key, 3)

    q_idx = jax.random.randint(kq, (B, T), 0, VOCAB, dtype=jnp.int32)
    a_idx = jax.random.randint(ka, (B, T), 0, VOCAB, dtype=jnp.int32)

    embedding, raw_layers, fc_w_t, fc_b = make_params(kp, VOCAB, EMB, HIDDEN, LAYERS)
    packed_layers = pack_kernel_params(raw_layers, HIDDEN)   # one-time packing

    fwd = jax.jit(functools.partial(siamese_lstm_forward,
                                    num_layers=LAYERS, hidden=HIDDEN))
    out = jax.block_until_ready(
        fwd(q_idx, a_idx, embedding, packed_layers, fc_w_t, fc_b))

    ref = reference_forward(q_idx, a_idx, embedding, raw_layers, fc_w_t, fc_b,
                            LAYERS, HIDDEN)

    assert out.shape == (B, 2)
    assert bool(jnp.all(jnp.isfinite(out)))
    assert bool(jnp.allclose(out, ref, atol=2e-3, rtol=2e-3))
    print("KERNEL_OK")
</pallas_src>

<mosaic_0001>
module attributes {stable_mosaic.version = 11 : i64} {
  func.func @kernel(%arg0: memref<64x64xf32, #tpu.memory_space<vmem>>, %arg1: memref<64x256xf32, #tpu.memory_space<vmem>>, %arg2: memref<64x256xf32, #tpu.memory_space<vmem>>, %arg3: memref<1x256xf32, #tpu.memory_space<vmem>>, %arg4: memref<128x256xf32, #tpu.memory_space<vmem>>, %arg5: memref<64x256xf32, #tpu.memory_space<vmem>>, %arg6: memref<1x256xf32, #tpu.memory_space<vmem>>, %arg7: memref<2x2xf32, #tpu.memory_space<vmem>>, %arg8: memref<1x2xf32, #tpu.memory_space<vmem>>, %arg9: memref<8x128xf32, #tpu.memory_space<vmem>>, %arg10: memref<64x256xf32, #tpu.memory_space<vmem>>, %arg11: memref<64x128xf32, #tpu.memory_space<vmem>>) attributes {dimension_semantics = [], scalar_prefetch = 0 : i64, scratch_operands = 2 : i64, tpu.core_type = #tpu.core_type<tc>} {
    %c0 = arith.constant 0 : index
    %c0_0 = arith.constant 0 : index
    %0 = vector.load %arg1[%c0, %c0_0] : memref<64x256xf32, #tpu.memory_space<vmem>>, vector<64x256xf32>
    %c0_1 = arith.constant 0 : index
    %c0_2 = arith.constant 0 : index
    %1 = vector.load %arg2[%c0_1, %c0_2] : memref<64x256xf32, #tpu.memory_space<vmem>>, vector<64x256xf32>
    %c0_3 = arith.constant 0 : index
    %c0_4 = arith.constant 0 : index
    %2 = vector.load %arg3[%c0_3, %c0_4] : memref<1x256xf32, #tpu.memory_space<vmem>>, vector<1x256xf32>
    %c0_5 = arith.constant 0 : index
    %c0_6 = arith.constant 0 : index
    %3 = vector.load %arg0[%c0_5, %c0_6] : memref<64x64xf32, #tpu.memory_space<vmem>>, vector<64x64xf32>
    %cst = arith.constant dense<0.000000e+00> : vector<64x256xf32>
    %4 = tpu.matmul %3, %0, %cst {dimension_numbers = #tpu.dot_dimension_numbers<[1], [0], [0], [1], [0, 0, 1, 1], [], []>} : vector<64x64xf32>, vector<64x256xf32>, vector<64x256xf32> -> vector<64x256xf32>
    %5 = vector.broadcast %2 : vector<1x256xf32> to vector<64x256xf32>
    %6 = arith.addf %4, %5 : vector<64x256xf32>
    %c0_7 = arith.constant 0 : index
    %c0_8 = arith.constant 0 : index
    %7 = vector.load %arg10[%c0_7, %c0_8] : memref<64x256xf32, #tpu.memory_space<vmem>>, vector<64x256xf32>
    tpu.vector_store %arg10[%c0_7, %c0_8], %6 {strides = array<i32>} : memref<64x256xf32, #tpu.memory_space<vmem>>, vector<64x256xf32>,
    %cst_9 = arith.constant 0.000000e+00 : f32
    %8 = vector.broadcast %cst_9 : f32 to vector<8x64xf32>
    %cst_10 = arith.constant 0.000000e+00 : f32
    %9 = vector.broadcast %cst_10 : f32 to vector<8x64xf32>
    %c0_11 = arith.constant 0 : index
    %c0_12 = arith.constant 0 : index
    %10 = vector.load %arg10[%c0_11, %c0_12] : memref<64x256xf32, #tpu.memory_space<vmem>>, vector<8x256xf32>
    %cst_13 = arith.constant dense<0.000000e+00> : vector<8x256xf32>
    %11 = tpu.matmul %8, %1, %cst_13 {dimension_numbers = #tpu.dot_dimension_numbers<[1], [0], [0], [1], [0, 0, 1, 1], [], []>} : vector<8x64xf32>, vector<64x256xf32>, vector<8x256xf32> -> vector<8x256xf32>
    %12 = arith.addf %10, %11 : vector<8x256xf32>
    %13 = vector.extract_strided_slice %12 {offsets = [0, 0], sizes = [8, 192], strides = [1, 1]} : vector<8x256xf32> to vector<8x192xf32>
    %14 = arith.negf %13 : vector<8x192xf32>
    %15 = math.exp %14 : vector<8x192xf32>
    %cst_14 = arith.constant 1.000000e+00 : f32
    %16 = vector.broadcast %cst_14 : f32 to vector<8x192xf32>
    %17 = arith.addf %16, %15 : vector<8x192xf32>
    %18 = arith.divf %16, %17 : vector<8x192xf32>
    %19 = vector.extract_strided_slice %12 {offsets = [0, 192], sizes = [8, 64], strides = [1, 1]} : vector<8x256xf32> to vector<8x64xf32>
    %20 = math.tanh %19 : vector<8x64xf32>
    %21 = vector.extract_strided_slice %18 {offsets = [0, 64], sizes = [8, 64], strides = [1, 1]} : vector<8x192xf32> to vector<8x64xf32>
    %22 = arith.mulf %21, %9 : vector<8x64xf32>
    %23 = vector.extract_strided_slice %18 {offsets = [0, 0], sizes = [8, 64], strides = [1, 1]} : vector<8x192xf32> to vector<8x64xf32>
    %24 = arith.mulf %23, %20 : vector<8x64xf32>
    %25 = arith.addf %22, %24 : vector<8x64xf32>
    %26 = vector.extract_strided_slice %18 {offsets = [0, 128], sizes = [8, 64], strides = [1, 1]} : vector<8x192xf32> to vector<8x64xf32>
    %27 = math.tanh %25 : vector<8x64xf32>
    %28 = arith.mulf %26, %27 : vector<8x64xf32>
    %c0_15 = arith.constant 0 : index
    %c0_16 = arith.constant 0 : index
    %29 = vector.load %arg11[%c0_15, %c0_16] : memref<64x128xf32, #tpu.memory_space<vmem>>, vector<8x64xf32>
    tpu.vector_store %arg11[%c0_15, %c0_16], %28 {strides = array<i32>} : memref<64x128xf32, #tpu.memory_space<vmem>>, vector<8x64xf32>,
    %c56 = arith.constant 56 : index
    %c64 = arith.constant 64 : index
    %30 = vector.load %arg11[%c56, %c64] : memref<64x128xf32, #tpu.memory_space<vmem>>, vector<8x64xf32>
    tpu.vector_store %arg11[%c56, %c64], %28 {strides = array<i32>} : memref<64x128xf32, #tpu.memory_space<vmem>>, vector<8x64xf32>,
    %c8 = arith.constant 8 : index
    %c0_17 = arith.constant 0 : index
    %31 = vector.load %arg10[%c8, %c0_17] : memref<64x256xf32, #tpu.memory_space<vmem>>, vector<8x256xf32>
    %cst_18 = arith.constant dense<0.000000e+00> : vector<8x256xf32>
    %32 = tpu.matmul %28, %1, %cst_18 {dimension_numbers = #tpu.dot_dimension_numbers<[1], [0], [0], [1], [0, 0, 1, 1], [], []>} : vector<8x64xf32>, vector<64x256xf32>, vector<8x256xf32> -> vector<8x256xf32>
    %33 = arith.addf %31, %32 : vector<8x256xf32>
    %34 = vector.extract_strided_slice %33 {offsets = [0, 0], sizes = [8, 192], strides = [1, 1]} : vector<8x256xf32> to vector<8x192xf32>
    %35 = arith.negf %34 : vector<8x192xf32>
    %36 = math.exp %35 : vector<8x192xf32>
    %cst_19 = arith.constant 1.000000e+00 : f32
    %37 = vector.broadcast %cst_19 : f32 to vector<8x192xf32>
    %38 = arith.addf %37, %36 : vector<8x192xf32>
    %39 = arith.divf %37, %38 : vector<8x192xf32>
    %40 = vector.extract_strided_slice %33 {offsets = [0, 192], sizes = [8, 64], strides = [1, 1]} : vector<8x256xf32> to vector<8x64xf32>
    %41 = math.tanh %40 : vector<8x64xf32>
    %42 = vector.extract_strided_slice %39 {offsets = [0, 64], sizes = [8, 64], strides = [1, 1]} : vector<8x192xf32> to vector<8x64xf32>
    %43 = arith.mulf %42, %25 : vector<8x64xf32>
    %44 = vector.extract_strided_slice %39 {offsets = [0, 0], sizes = [8, 64], strides = [1, 1]} : vector<8x192xf32> to vector<8x64xf32>
    %45 = arith.mulf %44, %41 : vector<8x64xf32>
    %46 = arith.addf %43, %45 : vector<8x64xf32>
    %47 = vector.extract_strided_slice %39 {offsets = [0, 128], sizes = [8, 64], strides = [1, 1]} : vector<8x192xf32> to vector<8x64xf32>
    %48 = math.tanh %46 : vector<8x64xf32>
    %49 = arith.mulf %47, %48 : vector<8x64xf32>
    %c8_20 = arith.constant 8 : index
    %c0_21 = arith.constant 0 : index
    %50 = vector.load %arg11[%c8_20, %c0_21] : memref<64x128xf32, #tpu.memory_space<vmem>>, vector<8x64xf32>
    tpu.vector_store %arg11[%c8_20, %c0_21], %49 {strides = array<i32>} : memref<64x128xf32, #tpu.memory_space<vmem>>, vector<8x64xf32>,
    %c48 = arith.constant 48 : index
    %c64_22 = arith.constant 64 : index
    %51 = vector.load %arg11[%c48, %c64_22] : memref<64x128xf32, #tpu.memory_space<vmem>>, vector<8x64xf32>
    tpu.vector_store %arg11[%c48, %c64_22], %49 {strides = array<i32>} : memref<64x128xf32, #tpu.memory_space<vmem>>, vector<8x64xf32>,
    %c16 = arith.constant 16 : index
    %c0_23 = arith.constant 0 : index
    %52 = vector.load %arg10[%c16, %c0_23] : memref<64x256xf32, #tpu.memory_space<vmem>>, vector<8x256xf32>
    %cst_24 = arith.constant dense<0.000000e+00> : vector<8x256xf32>
    %53 = tpu.matmul %49, %1, %cst_24 {dimension_numbers = #tpu.dot_dimension_numbers<[1], [0], [0], [1], [0, 0, 1, 1], [], []>} : vector<8x64xf32>, vector<64x256xf32>, vector<8x256xf32> -> vector<8x256xf32>
    %54 = arith.addf %52, %53 : vector<8x256xf32>
    %55 = vector.extract_strided_slice %54 {offsets = [0, 0], sizes = [8, 192], strides = [1, 1]} : vector<8x256xf32> to vector<8x192xf32>
    %56 = arith.negf %55 : vector<8x192xf32>
    %57 = math.exp %56 : vector<8x192xf32>
    %cst_25 = arith.constant 1.000000e+00 : f32
    %58 = vector.broadcast %cst_25 : f32 to vector<8x192xf32>
    %59 = arith.addf %58, %57 : vector<8x192xf32>
    %60 = arith.divf %58, %59 : vector<8x192xf32>
    %61 = vector.extract_strided_slice %54 {offsets = [0, 192], sizes = [8, 64], strides = [1, 1]} : vector<8x256xf32> to vector<8x64xf32>
    %62 = math.tanh %61 : vector<8x64xf32>
    %63 = vector.extract_strided_slice %60 {offsets = [0, 64], sizes = [8, 64], strides = [1, 1]} : vector<8x192xf32> to vector<8x64xf32>
    %64 = arith.mulf %63, %46 : vector<8x64xf32>
    %65 = vector.extract_strided_slice %60 {offsets = [0, 0], sizes = [8, 64], strides = [1, 1]} : vector<8x192xf32> to vector<8x64xf32>
    %66 = arith.mulf %65, %62 : vector<8x64xf32>
    %67 = arith.addf %64, %66 : vector<8x64xf32>
    %68 = vector.extract_strided_slice %60 {offsets = [0, 128], sizes = [8, 64], strides = [1, 1]} : vector<8x192xf32> to vector<8x64xf32>
    %69 = math.tanh %67 : vector<8x64xf32>
    %70 = arith.mulf %68, %69 : vector<8x64xf32>
    %c16_26 = arith.constant 16 : index
    %c0_27 = arith.constant 0 : index
    %71 = vector.load %arg11[%c16_26, %c0_27] : memref<64x128xf32, #tpu.memory_space<vmem>>, vector<8x64xf32>
    tpu.vector_store %arg11[%c16_26, %c0_27], %70 {strides = array<i32>} : memref<64x128xf32, #tpu.memory_space<vmem>>, vector<8x64xf32>,
    %c40 = arith.constant 40 : index
    %c64_28 = arith.constant 64 : index
    %72 = vector.load %arg11[%c40, %c64_28] : memref<64x128xf32, #tpu.memory_space<vmem>>, vector<8x64xf32>
    tpu.vector_store %arg11[%c40, %c64_28], %70 {strides = array<i32>} : memref<64x128xf32, #tpu.memory_space<vmem>>, vector<8x64xf32>,
    %c24 = arith.constant 24 : index
    %c0_29 = arith.constant 0 : index
    %73 = vector.load %arg10[%c24, %c0_29] : memref<64x256xf32, #tpu.memory_space<vmem>>, vector<8x256xf32>
    %cst_30 = arith.constant dense<0.000000e+00> : vector<8x256xf32>
    %74 = tpu.matmul %70, %1, %cst_30 {dimension_numbers = #tpu.dot_dimension_numbers<[1], [0], [0], [1], [0, 0, 1, 1], [], []>} : vector<8x64xf32>, vector<64x256xf32>, vector<8x256xf32> -> vector<8x256xf32>
    %75 = arith.addf %73, %74 : vector<8x256xf32>
    %76 = vector.extract_strided_slice %75 {offsets = [0, 0], sizes = [8, 192], strides = [1, 1]} : vector<8x256xf32> to vector<8x192xf32>
    %77 = arith.negf %76 : vector<8x192xf32>
    %78 = math.exp %77 : vector<8x192xf32>
    %cst_31 = arith.constant 1.000000e+00 : f32
    %79 = vector.broadcast %cst_31 : f32 to vector<8x192xf32>
    %80 = arith.addf %79, %78 : vector<8x192xf32>
    %81 = arith.divf %79, %80 : vector<8x192xf32>
    %82 = vector.extract_strided_slice %75 {offsets = [0, 192], sizes = [8, 64], strides = [1, 1]} : vector<8x256xf32> to vector<8x64xf32>
    %83 = math.tanh %82 : vector<8x64xf32>
    %84 = vector.extract_strided_slice %81 {offsets = [0, 64], sizes = [8, 64], strides = [1, 1]} : vector<8x192xf32> to vector<8x64xf32>
    %85 = arith.mulf %84, %67 : vector<8x64xf32>
    %86 = vector.extract_strided_slice %81 {offsets = [0, 0], sizes = [8, 64], strides = [1, 1]} : vector<8x192xf32> to vector<8x64xf32>
    %87 = arith.mulf %86, %83 : vector<8x64xf32>
    %88 = arith.addf %85, %87 : vector<8x64xf32>
    %89 = vector.extract_strided_slice %81 {offsets = [0, 128], sizes = [8, 64], strides = [1, 1]} : vector<8x192xf32> to vector<8x64xf32>
    %90 = math.tanh %88 : vector<8x64xf32>
    %91 = arith.mulf %89, %90 : vector<8x64xf32>
    %c24_32 = arith.constant 24 : index
    %c0_33 = arith.constant 0 : index
    %92 = vector.load %arg11[%c24_32, %c0_33] : memref<64x128xf32, #tpu.memory_space<vmem>>, vector<8x64xf32>
    tpu.vector_store %arg11[%c24_32, %c0_33], %91 {strides = array<i32>} : memref<64x128xf32, #tpu.memory_space<vmem>>, vector<8x64xf32>,
    %c32 = arith.constant 32 : index
    %c64_34 = arith.constant 64 : index
    %93 = vector.load %arg11[%c32, %c64_34] : memref<64x128xf32, #tpu.memory_space<vmem>>, vector<8x64xf32>
    tpu.vector_store %arg11[%c32, %c64_34], %91 {strides = array<i32>} : memref<64x128xf32, #tpu.memory_space<vmem>>, vector<8x64xf32>,
    %c32_35 = arith.constant 32 : index
    %c0_36 = arith.constant 0 : index
    %94 = vector.load %arg10[%c32_35, %c0_36] : memref<64x256xf32, #tpu.memory_space<vmem>>, vector<8x256xf32>
    %cst_37 = arith.constant dense<0.000000e+00> : vector<8x256xf32>
    %95 = tpu.matmul %91, %1, %cst_37 {dimension_numbers = #tpu.dot_dimension_numbers<[1], [0], [0], [1], [0, 0, 1, 1], [], []>} : vector<8x64xf32>, vector<64x256xf32>, vector<8x256xf32> -> vector<8x256xf32>
    %96 = arith.addf %94, %95 : vector<8x256xf32>
    %97 = vector.extract_strided_slice %96 {offsets = [0, 0], sizes = [8, 192], strides = [1, 1]} : vector<8x256xf32> to vector<8x192xf32>
    %98 = arith.negf %97 : vector<8x192xf32>
    %99 = math.exp %98 : vector<8x192xf32>
    %cst_38 = arith.constant 1.000000e+00 : f32
    %100 = vector.broadcast %cst_38 : f32 to vector<8x192xf32>
    %101 = arith.addf %100, %99 : vector<8x192xf32>
    %102 = arith.divf %100, %101 : vector<8x192xf32>
    %103 = vector.extract_strided_slice %96 {offsets = [0, 192], sizes = [8, 64], strides = [1, 1]} : vector<8x256xf32> to vector<8x64xf32>
    %104 = math.tanh %103 : vector<8x64xf32>
    %105 = vector.extract_strided_slice %102 {offsets = [0, 64], sizes = [8, 64], strides = [1, 1]} : vector<8x192xf32> to vector<8x64xf32>
    %106 = arith.mulf %105, %88 : vector<8x64xf32>
    %107 = vector.extract_strided_slice %102 {offsets = [0, 0], sizes = [8, 64], strides = [1, 1]} : vector<8x192xf32> to vector<8x64xf32>
    %108 = arith.mulf %107, %104 : vector<8x64xf32>
    %109 = arith.addf %106, %108 : vector<8x64xf32>
    %110 = vector.extract_strided_slice %102 {offsets = [0, 128], sizes = [8, 64], strides = [1, 1]} : vector<8x192xf32> to vector<8x64xf32>
    %111 = math.tanh %109 : vector<8x64xf32>
    %112 = arith.mulf %110, %111 : vector<8x64xf32>
    %c32_39 = arith.constant 32 : index
    %c0_40 = arith.constant 0 : index
    %113 = vector.load %arg11[%c32_39, %c0_40] : memref<64x128xf32, #tpu.memory_space<vmem>>, vector<8x64xf32>
    tpu.vector_store %arg11[%c32_39, %c0_40], %112 {strides = array<i32>} : memref<64x128xf32, #tpu.memory_space<vmem>>, vector<8x64xf32>,
    %c24_41 = arith.constant 24 : index
    %c64_42 = arith.constant 64 : index
    %114 = vector.load %arg11[%c24_41, %c64_42] : memref<64x128xf32, #tpu.memory_space<vmem>>, vector<8x64xf32>
    tpu.vector_store %arg11[%c24_41, %c64_42], %112 {strides = array<i32>} : memref<64x128xf32, #tpu.memory_space<vmem>>, vector<8x64xf32>,
    %c40_43 = arith.constant 40 : index
    %c0_44 = arith.constant 0 : index
    %115 = vector.load %arg10[%c40_43, %c0_44] : memref<64x256xf32, #tpu.memory_space<vmem>>, vector<8x256xf32>
    %cst_45 = arith.constant dense<0.000000e+00> : vector<8x256xf32>
    %116 = tpu.matmul %112, %1, %cst_45 {dimension_numbers = #tpu.dot_dimension_numbers<[1], [0], [0], [1], [0, 0, 1, 1], [], []>} : vector<8x64xf32>, vector<64x256xf32>, vector<8x256xf32> -> vector<8x256xf32>
    %117 = arith.addf %115, %116 : vector<8x256xf32>
    %118 = vector.extract_strided_slice %117 {offsets = [0, 0], sizes = [8, 192], strides = [1, 1]} : vector<8x256xf32> to vector<8x192xf32>
    %119 = arith.negf %118 : vector<8x192xf32>
    %120 = math.exp %119 : vector<8x192xf32>
    %cst_46 = arith.constant 1.000000e+00 : f32
    %121 = vector.broadcast %cst_46 : f32 to vector<8x192xf32>
    %122 = arith.addf %121, %120 : vector<8x192xf32>
    %123 = arith.divf %121, %122 : vector<8x192xf32>
    %124 = vector.extract_strided_slice %117 {offsets = [0, 192], sizes = [8, 64], strides = [1, 1]} : vector<8x256xf32> to vector<8x64xf32>
    %125 = math.tanh %124 : vector<8x64xf32>
    %126 = vector.extract_strided_slice %123 {offsets = [0, 64], sizes = [8, 64], strides = [1, 1]} : vector<8x192xf32> to vector<8x64xf32>
    %127 = arith.mulf %126, %109 : vector<8x64xf32>
    %128 = vector.extract_strided_slice %123 {offsets = [0, 0], sizes = [8, 64], strides = [1, 1]} : vector<8x192xf32> to vector<8x64xf32>
    %129 = arith.mulf %128, %125 : vector<8x64xf32>
    %130 = arith.addf %127, %129 : vector<8x64xf32>
    %131 = vector.extract_strided_slice %123 {offsets = [0, 128], sizes = [8, 64], strides = [1, 1]} : vector<8x192xf32> to vector<8x64xf32>
    %132 = math.tanh %130 : vector<8x64xf32>
    %133 = arith.mulf %131, %132 : vector<8x64xf32>
    %c40_47 = arith.constant 40 : index
    %c0_48 = arith.constant 0 : index
    %134 = vector.load %arg11[%c40_47, %c0_48] : memref<64x128xf32, #tpu.memory_space<vmem>>, vector<8x64xf32>
    tpu.vector_store %arg11[%c40_47, %c0_48], %133 {strides = array<i32>} : memref<64x128xf32, #tpu.memory_space<vmem>>, vector<8x64xf32>,
    %c16_49 = arith.constant 16 : index
    %c64_50 = arith.constant 64 : index
    %135 = vector.load %arg11[%c16_49, %c64_50] : memref<64x128xf32, #tpu.memory_space<vmem>>, vector<8x64xf32>
    tpu.vector_store %arg11[%c16_49, %c64_50], %133 {strides = array<i32>} : memref<64x128xf32, #tpu.memory_space<vmem>>, vector<8x64xf32>,
    %c48_51 = arith.constant 48 : index
    %c0_52 = arith.constant 0 : index
    %136 = vector.load %arg10[%c48_51, %c0_52] : memref<64x256xf32, #tpu.memory_space<vmem>>, vector<8x256xf32>
    %cst_53 = arith.constant dense<0.000000e+00> : vector<8x256xf32>
    %137 = tpu.matmul %133, %1, %cst_53 {dimension_numbers = #tpu.dot_dimension_numbers<[1], [0], [0], [1], [0, 0, 1, 1], [], []>} : vector<8x64xf32>, vector<64x256xf32>, vector<8x256xf32> -> vector<8x256xf32>
    %138 = arith.addf %136, %137 : vector<8x256xf32>
    %139 = vector.extract_strided_slice %138 {offsets = [0, 0], sizes = [8, 192], strides = [1, 1]} : vector<8x256xf32> to vector<8x192xf32>
    %140 = arith.negf %139 : vector<8x192xf32>
    %141 = math.exp %140 : vector<8x192xf32>
    %cst_54 = arith.constant 1.000000e+00 : f32
    %142 = vector.broadcast %cst_54 : f32 to vector<8x192xf32>
    %143 = arith.addf %142, %141 : vector<8x192xf32>
    %144 = arith.divf %142, %143 : vector<8x192xf32>
    %145 = vector.extract_strided_slice %138 {offsets = [0, 192], sizes = [8, 64], strides = [1, 1]} : vector<8x256xf32> to vector<8x64xf32>
    %146 = math.tanh %145 : vector<8x64xf32>
    %147 = vector.extract_strided_slice %144 {offsets = [0, 64], sizes = [8, 64], strides = [1, 1]} : vector<8x192xf32> to vector<8x64xf32>
    %148 = arith.mulf %147, %130 : vector<8x64xf32>
    %149 = vector.extract_strided_slice %144 {offsets = [0, 0], sizes = [8, 64], strides = [1, 1]} : vector<8x192xf32> to vector<8x64xf32>
    %150 = arith.mulf %149, %146 : vector<8x64xf32>
    %151 = arith.addf %148, %150 : vector<8x64xf32>
    %152 = vector.extract_strided_slice %144 {offsets = [0, 128], sizes = [8, 64], strides = [1, 1]} : vector<8x192xf32> to vector<8x64xf32>
    %153 = math.tanh %151 : vector<8x64xf32>
    %154 = arith.mulf %152, %153 : vector<8x64xf32>
    %c48_55 = arith.constant 48 : index
    %c0_56 = arith.constant 0 : index
    %155 = vector.load %arg11[%c48_55, %c0_56] : memref<64x128xf32, #tpu.memory_space<vmem>>, vector<8x64xf32>
    tpu.vector_store %arg11[%c48_55, %c0_56], %154 {strides = array<i32>} : memref<64x128xf32, #tpu.memory_space<vmem>>, vector<8x64xf32>,
    %c8_57 = arith.constant 8 : index
    %c64_58 = arith.constant 64 : index
    %156 = vector.load %arg11[%c8_57, %c64_58] : memref<64x128xf32, #tpu.memory_space<vmem>>, vector<8x64xf32>
    tpu.vector_store %arg11[%c8_57, %c64_58], %154 {strides = array<i32>} : memref<64x128xf32, #tpu.memory_space<vmem>>, vector<8x64xf32>,
    %c56_59 = arith.constant 56 : index
    %c0_60 = arith.constant 0 : index
    %157 = vector.load %arg10[%c56_59, %c0_60] : memref<64x256xf32, #tpu.memory_space<vmem>>, vector<8x256xf32>
    %cst_61 = arith.constant dense<0.000000e+00> : vector<8x256xf32>
    %158 = tpu.matmul %154, %1, %cst_61 {dimension_numbers = #tpu.dot_dimension_numbers<[1], [0], [0], [1], [0, 0, 1, 1], [], []>} : vector<8x64xf32>, vector<64x256xf32>, vector<8x256xf32> -> vector<8x256xf32>
    %159 = arith.addf %157, %158 : vector<8x256xf32>
    %160 = vector.extract_strided_slice %159 {offsets = [0, 0], sizes = [8, 192], strides = [1, 1]} : vector<8x256xf32> to vector<8x192xf32>
    %161 = arith.negf %160 : vector<8x192xf32>
    %162 = math.exp %161 : vector<8x192xf32>
    %cst_62 = arith.constant 1.000000e+00 : f32
    %163 = vector.broadcast %cst_62 : f32 to vector<8x192xf32>
    %164 = arith.addf %163, %162 : vector<8x192xf32>
    %165 = arith.divf %163, %164 : vector<8x192xf32>
    %166 = vector.extract_strided_slice %159 {offsets = [0, 192], sizes = [8, 64], strides = [1, 1]} : vector<8x256xf32> to vector<8x64xf32>
    %167 = math.tanh %166 : vector<8x64xf32>
    %168 = vector.extract_strided_slice %165 {offsets = [0, 64], sizes = [8, 64], strides = [1, 1]} : vector<8x192xf32> to vector<8x64xf32>
    %169 = arith.mulf %168, %151 : vector<8x64xf32>
    %170 = vector.extract_strided_slice %165 {offsets = [0, 0], sizes = [8, 64], strides = [1, 1]} : vector<8x192xf32> to vector<8x64xf32>
    %171 = arith.mulf %170, %167 : vector<8x64xf32>
    %172 = arith.addf %169, %171 : vector<8x64xf32>
    %173 = vector.extract_strided_slice %165 {offsets = [0, 128], sizes = [8, 64], strides = [1, 1]} : vector<8x192xf32> to vector<8x64xf32>
    %174 = math.tanh %172 : vector<8x64xf32>
    %175 = arith.mulf %173, %174 : vector<8x64xf32>
    %c56_63 = arith.constant 56 : index
    %c0_64 = arith.constant 0 : index
    %176 = vector.load %arg11[%c56_63, %c0_64] : memref<64x128xf32, #tpu.memory_space<vmem>>, vector<8x64xf32>
    tpu.vector_store %arg11[%c56_63, %c0_64], %175 {strides = array<i32>} : memref<64x128xf32, #tpu.memory_space<vmem>>, vector<8x64xf32>,
    %c0_65 = arith.constant 0 : index
    %c64_66 = arith.constant 64 : index
    %177 = vector.load %arg11[%c0_65, %c64_66] : memref<64x128xf32, #tpu.memory_space<vmem>>, vector<8x64xf32>
    tpu.vector_store %arg11[%c0_65, %c64_66], %175 {strides = array<i32>} : memref<64x128xf32, #tpu.memory_space<vmem>>, vector<8x64xf32>,
    %c0_67 = arith.constant 0 : index
    %c0_68 = arith.constant 0 : index
    %178 = vector.load %arg4[%c0_67, %c0_68] : memref<128x256xf32, #tpu.memory_space<vmem>>, vector<128x256xf32>
    %c0_69 = arith.constant 0 : index
    %c0_70 = arith.constant 0 : index
    %179 = vector.load %arg5[%c0_69, %c0_70] : memref<64x256xf32, #tpu.memory_space<vmem>>, vector<64x256xf32>
    %c0_71 = arith.constant 0 : index
    %c0_72 = arith.constant 0 : index
    %180 = vector.load %arg6[%c0_71, %c0_72] : memref<1x256xf32, #tpu.memory_space<vmem>>, vector<1x256xf32>
    %c0_73 = arith.constant 0 : index
    %c0_74 = arith.constant 0 : index
    %181 = vector.load %arg11[%c0_73, %c0_74] : memref<64x128xf32, #tpu.memory_space<vmem>>, vector<64x128xf32>
    %cst_75 = arith.constant dense<0.000000e+00> : vector<64x256xf32>
    %182 = tpu.matmul %181, %178, %cst_75 {dimension_numbers = #tpu.dot_dimension_numbers<[1], [0], [0], [1], [0, 0, 1, 1], [], []>} : vector<64x128xf32>, vector<128x256xf32>, vector<64x256xf32> -> vector<64x256xf32>
    %183 = vector.broadcast %180 : vector<1x256xf32> to vector<64x256xf32>
    %184 = arith.addf %182, %183 : vector<64x256xf32>
    %c0_76 = arith.constant 0 : index
    %c0_77 = arith.constant 0 : index
    %185 = vector.load %arg10[%c0_76, %c0_77] : memref<64x256xf32, #tpu.memory_space<vmem>>, vector<64x256xf32>
    tpu.vector_store %arg10[%c0_76, %c0_77], %184 {strides = array<i32>} : memref<64x256xf32, #tpu.memory_space<vmem>>, vector<64x256xf32>,
    %cst_78 = arith.constant 0.000000e+00 : f32
    %186 = vector.broadcast %cst_78 : f32 to vector<8x64xf32>
    %cst_79 = arith.constant 0.000000e+00 : f32
    %187 = vector.broadcast %cst_79 : f32 to vector<8x64xf32>
    %c0_80 = arith.constant 0 : index
    %c0_81 = arith.constant 0 : index
    %188 = vector.load %arg10[%c0_80, %c0_81] : memref<64x256xf32, #tpu.memory_space<vmem>>, vector<8x256xf32>
    %cst_82 = arith.constant dense<0.000000e+00> : vector<8x256xf32>
    %189 = tpu.matmul %186, %179, %cst_82 {dimension_numbers = #tpu.dot_dimension_numbers<[1], [0], [0], [1], [0, 0, 1, 1], [], []>} : vector<8x64xf32>, vector<64x256xf32>, vector<8x256xf32> -> vector<8x256xf32>
    %190 = arith.addf %188, %189 : vector<8x256xf32>
    %191 = vector.extract_strided_slice %190 {offsets = [0, 0], sizes = [8, 192], strides = [1, 1]} : vector<8x256xf32> to vector<8x192xf32>
    %192 = arith.negf %191 : vector<8x192xf32>
    %193 = math.exp %192 : vector<8x192xf32>
    %cst_83 = arith.constant 1.000000e+00 : f32
    %194 = vector.broadcast %cst_83 : f32 to vector<8x192xf32>
    %195 = arith.addf %194, %193 : vector<8x192xf32>
    %196 = arith.divf %194, %195 : vector<8x192xf32>
    %197 = vector.extract_strided_slice %190 {offsets = [0, 192], sizes = [8, 64], strides = [1, 1]} : vector<8x256xf32> to vector<8x64xf32>
    %198 = math.tanh %197 : vector<8x64xf32>
    %199 = vector.extract_strided_slice %196 {offsets = [0, 64], sizes = [8, 64], strides = [1, 1]} : vector<8x192xf32> to vector<8x64xf32>
    %200 = arith.mulf %199, %187 : vector<8x64xf32>
    %201 = vector.extract_strided_slice %196 {offsets = [0, 0], sizes = [8, 64], strides = [1, 1]} : vector<8x192xf32> to vector<8x64xf32>
    %202 = arith.mulf %201, %198 : vector<8x64xf32>
    %203 = arith.addf %200, %202 : vector<8x64xf32>
    %204 = vector.extract_strided_slice %196 {offsets = [0, 128], sizes = [8, 64], strides = [1, 1]} : vector<8x192xf32> to vector<8x64xf32>
    %205 = math.tanh %203 : vector<8x64xf32>
    %206 = arith.mulf %204, %205 : vector<8x64xf32>
    %c8_84 = arith.constant 8 : index
    %c0_85 = arith.constant 0 : index
    %207 = vector.load %arg10[%c8_84, %c0_85] : memref<64x256xf32, #tpu.memory_space<vmem>>, vector<8x256xf32>
    %cst_86 = arith.constant dense<0.000000e+00> : vector<8x256xf32>
    %208 = tpu.matmul %206, %179, %cst_86 {dimension_numbers = #tpu.dot_dimension_numbers<[1], [0], [0], [1], [0, 0, 1, 1], [], []>} : vector<8x64xf32>, vector<64x256xf32>, vector<8x256xf32> -> vector<8x256xf32>
    %209 = arith.addf %207, %208 : vector<8x256xf32>
    %210 = vector.extract_strided_slice %209 {offsets = [0, 0], sizes = [8, 192], strides = [1, 1]} : vector<8x256xf32> to vector<8x192xf32>
    %211 = arith.negf %210 : vector<8x192xf32>
    %212 = math.exp %211 : vector<8x192xf32>
    %cst_87 = arith.constant 1.000000e+00 : f32
    %213 = vector.broadcast %cst_87 : f32 to vector<8x192xf32>
    %214 = arith.addf %213, %212 : vector<8x192xf32>
    %215 = arith.divf %213, %214 : vector<8x192xf32>
    %216 = vector.extract_strided_slice %209 {offsets = [0, 192], sizes = [8, 64], strides = [1, 1]} : vector<8x256xf32> to vector<8x64xf32>
    %217 = math.tanh %216 : vector<8x64xf32>
    %218 = vector.extract_strided_slice %215 {offsets = [0, 64], sizes = [8, 64], strides = [1, 1]} : vector<8x192xf32> to vector<8x64xf32>
    %219 = arith.mulf %218, %203 : vector<8x64xf32>
    %220 = vector.extract_strided_slice %215 {offsets = [0, 0], sizes = [8, 64], strides = [1, 1]} : vector<8x192xf32> to vector<8x64xf32>
    %221 = arith.mulf %220, %217 : vector<8x64xf32>
    %222 = arith.addf %219, %221 : vector<8x64xf32>
    %223 = vector.extract_strided_slice %215 {offsets = [0, 128], sizes = [8, 64], strides = [1, 1]} : vector<8x192xf32> to vector<8x64xf32>
    %224 = math.tanh %222 : vector<8x64xf32>
    %225 = arith.mulf %223, %224 : vector<8x64xf32>
    %c16_88 = arith.constant 16 : index
    %c0_89 = arith.constant 0 : index
    %226 = vector.load %arg10[%c16_88, %c0_89] : memref<64x256xf32, #tpu.memory_space<vmem>>, vector<8x256xf32>
    %cst_90 = arith.constant dense<0.000000e+00> : vector<8x256xf32>
    %227 = tpu.matmul %225, %179, %cst_90 {dimension_numbers = #tpu.dot_dimension_numbers<[1], [0], [0], [1], [0, 0, 1, 1], [], []>} : vector<8x64xf32>, vector<64x256xf32>, vector<8x256xf32> -> vector<8x256xf32>
    %228 = arith.addf %226, %227 : vector<8x256xf32>
    %229 = vector.extract_strided_slice %228 {offsets = [0, 0], sizes = [8, 192], strides = [1, 1]} : vector<8x256xf32> to vector<8x192xf32>
    %230 = arith.negf %229 : vector<8x192xf32>
    %231 = math.exp %230 : vector<8x192xf32>
    %cst_91 = arith.constant 1.000000e+00 : f32
    %232 = vector.broadcast %cst_91 : f32 to vector<8x192xf32>
    %233 = arith.addf %232, %231 : vector<8x192xf32>
    %234 = arith.divf %232, %233 : vector<8x192xf32>
    %235 = vector.extract_strided_slice %228 {offsets = [0, 192], sizes = [8, 64], strides = [1, 1]} : vector<8x256xf32> to vector<8x64xf32>
    %236 = math.tanh %235 : vector<8x64xf32>
    %237 = vector.extract_strided_slice %234 {offsets = [0, 64], sizes = [8, 64], strides = [1, 1]} : vector<8x192xf32> to vector<8x64xf32>
    %238 = arith.mulf %237, %222 : vector<8x64xf32>
    %239 = vector.extract_strided_slice %234 {offsets = [0, 0], sizes = [8, 64], strides = [1, 1]} : vector<8x192xf32> to vector<8x64xf32>
    %240 = arith.mulf %239, %236 : vector<8x64xf32>
    %241 = arith.addf %238, %240 : vector<8x64xf32>
    %242 = vector.extract_strided_slice %234 {offsets = [0, 128], sizes = [8, 64], strides = [1, 1]} : vector<8x192xf32> to vector<8x64xf32>
    %243 = math.tanh %241 : vector<8x64xf32>
    %244 = arith.mulf %242, %243 : vector<8x64xf32>
    %c24_92 = arith.constant 24 : index
    %c0_93 = arith.constant 0 : index
    %245 = vector.load %arg10[%c24_92, %c0_93] : memref<64x256xf32, #tpu.memory_space<vmem>>, vector<8x256xf32>
    %cst_94 = arith.constant dense<0.000000e+00> : vector<8x256xf32>
    %246 = tpu.matmul %244, %179, %cst_94 {dimension_numbers = #tpu.dot_dimension_numbers<[1], [0], [0], [1], [0, 0, 1, 1], [], []>} : vector<8x64xf32>, vector<64x256xf32>, vector<8x256xf32> -> vector<8x256xf32>
    %247 = arith.addf %245, %246 : vector<8x256xf32>
    %248 = vector.extract_strided_slice %247 {offsets = [0, 0], sizes = [8, 192], strides = [1, 1]} : vector<8x256xf32> to vector<8x192xf32>
    %249 = arith.negf %248 : vector<8x192xf32>
    %250 = math.exp %249 : vector<8x192xf32>
    %cst_95 = arith.constant 1.000000e+00 : f32
    %251 = vector.broadcast %cst_95 : f32 to vector<8x192xf32>
    %252 = arith.addf %251, %250 : vector<8x192xf32>
    %253 = arith.divf %251, %252 : vector<8x192xf32>
    %254 = vector.extract_strided_slice %247 {offsets = [0, 192], sizes = [8, 64], strides = [1, 1]} : vector<8x256xf32> to vector<8x64xf32>
    %255 = math.tanh %254 : vector<8x64xf32>
    %256 = vector.extract_strided_slice %253 {offsets = [0, 64], sizes = [8, 64], strides = [1, 1]} : vector<8x192xf32> to vector<8x64xf32>
    %257 = arith.mulf %256, %241 : vector<8x64xf32>
    %258 = vector.extract_strided_slice %253 {offsets = [0, 0], sizes = [8, 64], strides = [1, 1]} : vector<8x192xf32> to vector<8x64xf32>
    %259 = arith.mulf %258, %255 : vector<8x64xf32>
    %260 = arith.addf %257, %259 : vector<8x64xf32>
    %261 = vector.extract_strided_slice %253 {offsets = [0, 128], sizes = [8, 64], strides = [1, 1]} : vector<8x192xf32> to vector<8x64xf32>
    %262 = math.tanh %260 : vector<8x64xf32>
    %263 = arith.mulf %261, %262 : vector<8x64xf32>
    %c32_96 = arith.constant 32 : index
    %c0_97 = arith.constant 0 : index
    %264 = vector.load %arg10[%c32_96, %c0_97] : memref<64x256xf32, #tpu.memory_space<vmem>>, vector<8x256xf32>
    %cst_98 = arith.constant dense<0.000000e+00> : vector<8x256xf32>
    %265 = tpu.matmul %263, %179, %cst_98 {dimension_numbers = #tpu.dot_dimension_numbers<[1], [0], [0], [1], [0, 0, 1, 1], [], []>} : vector<8x64xf32>, vector<64x256xf32>, vector<8x256xf32> -> vector<8x256xf32>
    %266 = arith.addf %264, %265 : vector<8x256xf32>
    %267 = vector.extract_strided_slice %266 {offsets = [0, 0], sizes = [8, 192], strides = [1, 1]} : vector<8x256xf32> to vector<8x192xf32>
    %268 = arith.negf %267 : vector<8x192xf32>
    %269 = math.exp %268 : vector<8x192xf32>
    %cst_99 = arith.constant 1.000000e+00 : f32
    %270 = vector.broadcast %cst_99 : f32 to vector<8x192xf32>
    %271 = arith.addf %270, %269 : vector<8x192xf32>
    %272 = arith.divf %270, %271 : vector<8x192xf32>
    %273 = vector.extract_strided_slice %266 {offsets = [0, 192], sizes = [8, 64], strides = [1, 1]} : vector<8x256xf32> to vector<8x64xf32>
    %274 = math.tanh %273 : vector<8x64xf32>
    %275 = vector.extract_strided_slice %272 {offsets = [0, 64], sizes = [8, 64], strides = [1, 1]} : vector<8x192xf32> to vector<8x64xf32>
    %276 = arith.mulf %275, %260 : vector<8x64xf32>
    %277 = vector.extract_strided_slice %272 {offsets = [0, 0], sizes = [8, 64], strides = [1, 1]} : vector<8x192xf32> to vector<8x64xf32>
    %278 = arith.mulf %277, %274 : vector<8x64xf32>
    %279 = arith.addf %276, %278 : vector<8x64xf32>
    %280 = vector.extract_strided_slice %272 {offsets = [0, 128], sizes = [8, 64], strides = [1, 1]} : vector<8x192xf32> to vector<8x64xf32>
    %281 = math.tanh %279 : vector<8x64xf32>
    %282 = arith.mulf %280, %281 : vector<8x64xf32>
    %c40_100 = arith.constant 40 : index
    %c0_101 = arith.constant 0 : index
    %283 = vector.load %arg10[%c40_100, %c0_101] : memref<64x256xf32, #tpu.memory_space<vmem>>, vector<8x256xf32>
    %cst_102 = arith.constant dense<0.000000e+00> : vector<8x256xf32>
    %284 = tpu.matmul %282, %179, %cst_102 {dimension_numbers = #tpu.dot_dimension_numbers<[1], [0], [0], [1], [0, 0, 1, 1], [], []>} : vector<8x64xf32>, vector<64x256xf32>, vector<8x256xf32> -> vector<8x256xf32>
    %285 = arith.addf %283, %284 : vector<8x256xf32>
    %286 = vector.extract_strided_slice %285 {offsets = [0, 0], sizes = [8, 192], strides = [1, 1]} : vector<8x256xf32> to vector<8x192xf32>
    %287 = arith.negf %286 : vector<8x192xf32>
    %288 = math.exp %287 : vector<8x192xf32>
    %cst_103 = arith.constant 1.000000e+00 : f32
    %289 = vector.broadcast %cst_103 : f32 to vector<8x192xf32>
    %290 = arith.addf %289, %288 : vector<8x192xf32>
    %291 = arith.divf %289, %290 : vector<8x192xf32>
    %292 = vector.extract_strided_slice %285 {offsets = [0, 192], sizes = [8, 64], strides = [1, 1]} : vector<8x256xf32> to vector<8x64xf32>
    %293 = math.tanh %292 : vector<8x64xf32>
    %294 = vector.extract_strided_slice %291 {offsets = [0, 64], sizes = [8, 64], strides = [1, 1]} : vector<8x192xf32> to vector<8x64xf32>
    %295 = arith.mulf %294, %279 : vector<8x64xf32>
    %296 = vector.extract_strided_slice %291 {offsets = [0, 0], sizes = [8, 64], strides = [1, 1]} : vector<8x192xf32> to vector<8x64xf32>
    %297 = arith.mulf %296, %293 : vector<8x64xf32>
    %298 = arith.addf %295, %297 : vector<8x64xf32>
    %299 = vector.extract_strided_slice %291 {offsets = [0, 128], sizes = [8, 64], strides = [1, 1]} : vector<8x192xf32> to vector<8x64xf32>
    %300 = math.tanh %298 : vector<8x64xf32>
    %301 = arith.mulf %299, %300 : vector<8x64xf32>
    %c48_104 = arith.constant 48 : index
    %c0_105 = arith.constant 0 : index
    %302 = vector.load %arg10[%c48_104, %c0_105] : memref<64x256xf32, #tpu.memory_space<vmem>>, vector<8x256xf32>
    %cst_106 = arith.constant dense<0.000000e+00> : vector<8x256xf32>
    %303 = tpu.matmul %301, %179, %cst_106 {dimension_numbers = #tpu.dot_dimension_numbers<[1], [0], [0], [1], [0, 0, 1, 1], [], []>} : vector<8x64xf32>, vector<64x256xf32>, vector<8x256xf32> -> vector<8x256xf32>
    %304 = arith.addf %302, %303 : vector<8x256xf32>
    %305 = vector.extract_strided_slice %304 {offsets = [0, 0], sizes = [8, 192], strides = [1, 1]} : vector<8x256xf32> to vector<8x192xf32>
    %306 = arith.negf %305 : vector<8x192xf32>
    %307 = math.exp %306 : vector<8x192xf32>
    %cst_107 = arith.constant 1.000000e+00 : f32
    %308 = vector.broadcast %cst_107 : f32 to vector<8x192xf32>
    %309 = arith.addf %308, %307 : vector<8x192xf32>
    %310 = arith.divf %308, %309 : vector<8x192xf32>
    %311 = vector.extract_strided_slice %304 {offsets = [0, 192], sizes = [8, 64], strides = [1, 1]} : vector<8x256xf32> to vector<8x64xf32>
    %312 = math.tanh %311 : vector<8x64xf32>
    %313 = vector.extract_strided_slice %310 {offsets = [0, 64], sizes = [8, 64], strides = [1, 1]} : vector<8x192xf32> to vector<8x64xf32>
    %314 = arith.mulf %313, %298 : vector<8x64xf32>
    %315 = vector.extract_strided_slice %310 {offsets = [0, 0], sizes = [8, 64], strides = [1, 1]} : vector<8x192xf32> to vector<8x64xf32>
    %316 = arith.mulf %315, %312 : vector<8x64xf32>
    %317 = arith.addf %314, %316 : vector<8x64xf32>
    %318 = vector.extract_strided_slice %310 {offsets = [0, 128], sizes = [8, 64], strides = [1, 1]} : vector<8x192xf32> to vector<8x64xf32>
    %319 = math.tanh %317 : vector<8x64xf32>
    %320 = arith.mulf %318, %319 : vector<8x64xf32>
    %c56_108 = arith.constant 56 : index
    %c0_109 = arith.constant 0 : index
    %321 = vector.load %arg10[%c56_108, %c0_109] : memref<64x256xf32, #tpu.memory_space<vmem>>, vector<8x256xf32>
    %cst_110 = arith.constant dense<0.000000e+00> : vector<8x256xf32>
    %322 = tpu.matmul %320, %179, %cst_110 {dimension_numbers = #tpu.dot_dimension_numbers<[1], [0], [0], [1], [0, 0, 1, 1], [], []>} : vector<8x64xf32>, vector<64x256xf32>, vector<8x256xf32> -> vector<8x256xf32>
    %323 = arith.addf %321, %322 : vector<8x256xf32>
    %324 = vector.extract_strided_slice %323 {offsets = [0, 0], sizes = [8, 192], strides = [1, 1]} : vector<8x256xf32> to vector<8x192xf32>
    %325 = arith.negf %324 : vector<8x192xf32>
    %326 = math.exp %325 : vector<8x192xf32>
    %cst_111 = arith.constant 1.000000e+00 : f32
    %327 = vector.broadcast %cst_111 : f32 to vector<8x192xf32>
    %328 = arith.addf %327, %326 : vector<8x192xf32>
    %329 = arith.divf %327, %328 : vector<8x192xf32>
    %330 = vector.extract_strided_slice %323 {offsets = [0, 192], sizes = [8, 64], strides = [1, 1]} : vector<8x256xf32> to vector<8x64xf32>
    %331 = math.tanh %330 : vector<8x64xf32>
    %332 = vector.extract_strided_slice %329 {offsets = [0, 64], sizes = [8, 64], strides = [1, 1]} : vector<8x192xf32> to vector<8x64xf32>
    %333 = arith.mulf %332, %317 : vector<8x64xf32>
    %334 = vector.extract_strided_slice %329 {offsets = [0, 0], sizes = [8, 64], strides = [1, 1]} : vector<8x192xf32> to vector<8x64xf32>
    %335 = arith.mulf %334, %331 : vector<8x64xf32>
    %336 = arith.addf %333, %335 : vector<8x64xf32>
    %337 = vector.extract_strided_slice %329 {offsets = [0, 128], sizes = [8, 64], strides = [1, 1]} : vector<8x192xf32> to vector<8x64xf32>
    %338 = math.tanh %336 : vector<8x64xf32>
    %339 = arith.mulf %337, %338 : vector<8x64xf32>
    %340 = vector.extract_strided_slice %339 {offsets = [0, 32], sizes = [2, 32], strides = [1, 1]} : vector<8x64xf32> to vector<2x32xf32>
    %341 = vector.extract_strided_slice %339 {offsets = [2, 32], sizes = [2, 32], strides = [1, 1]} : vector<8x64xf32> to vector<2x32xf32>
    %342 = arith.mulf %340, %341 : vector<2x32xf32>
    %cst_112 = arith.constant dense<0.000000e+00> : vector<2xf32>
    %343 = vector.multi_reduction <add>, %342, %cst_112 [1] : vector<2x32xf32> to vector<2xf32>
    %344 = vector.shape_cast %343 : vector<2xf32> to vector<2x1xf32>
    %345 = arith.mulf %340, %340 : vector<2x32xf32>
    %cst_113 = arith.constant dense<0.000000e+00> : vector<2xf32>
    %346 = vector.multi_reduction <add>, %345, %cst_113 [1] : vector<2x32xf32> to vector<2xf32>
    %347 = vector.shape_cast %346 : vector<2xf32> to vector<2x1xf32>
    %348 = math.sqrt %347 : vector<2x1xf32>
    %349 = arith.mulf %341, %341 : vector<2x32xf32>
    %cst_114 = arith.constant dense<0.000000e+00> : vector<2xf32>
    %350 = vector.multi_reduction <add>, %349, %cst_114 [1] : vector<2x32xf32> to vector<2xf32>
    %351 = vector.shape_cast %350 : vector<2xf32> to vector<2x1xf32>
    %352 = math.sqrt %351 : vector<2x1xf32>
    %353 = arith.mulf %348, %352 : vector<2x1xf32>
    %cst_115 = arith.constant 9.99999997E-7 : f32
    %354 = vector.broadcast %cst_115 : f32 to vector<2x1xf32>
    %355 = arith.maximumf %353, %354 : vector<2x1xf32>
    %356 = arith.divf %344, %355 : vector<2x1xf32>
    %357 = math.absf %356 : vector<2x1xf32>
    %358 = arith.subf %340, %341 : vector<2x32xf32>
    %359 = math.absf %358 : vector<2x32xf32>
    %cst_116 = arith.constant dense<0.000000e+00> : vector<2xf32>
    %360 = vector.multi_reduction <add>, %359, %cst_116 [1] : vector<2x32xf32> to vector<2xf32>
    %361 = vector.shape_cast %360 : vector<2xf32> to vector<2x1xf32>
    %cst_117 = arith.constant 0.000000e+00 : f32
    %362 = vector.broadcast %cst_117 : f32 to vector<2x1xf32>
    %363 = arith.subf %362, %361 : vector<2x1xf32>
    %364 = math.exp %363 : vector<2x1xf32>
    %c0_118 = arith.constant 0 : index
    %c0_119 = arith.constant 0 : index
    %365 = vector.load %arg7[%c0_118, %c0_119] : memref<2x2xf32, #tpu.memory_space<vmem>>, vector<2x2xf32>
    %366 = vector.extract_strided_slice %365 {offsets = [0, 0], sizes = [1, 2], strides = [1, 1]} : vector<2x2xf32> to vector<1x2xf32>
    %367 = vector.broadcast %357 : vector<2x1xf32> to vector<2x2xf32>
    %368 = vector.broadcast %366 : vector<1x2xf32> to vector<2x2xf32>
    %369 = arith.mulf %367, %368 : vector<2x2xf32>
    %370 = vector.extract_strided_slice %365 {offsets = [1, 0], sizes = [1, 2], strides = [1, 1]} : vector<2x2xf32> to vector<1x2xf32>
    %371 = vector.broadcast %364 : vector<2x1xf32> to vector<2x2xf32>
    %372 = vector.broadcast %370 : vector<1x2xf32> to vector<2x2xf32>
    %373 = arith.mulf %371, %372 : vector<2x2xf32>
    %374 = arith.addf %369, %373 : vector<2x2xf32>
    %c0_120 = arith.constant 0 : index
    %c0_121 = arith.constant 0 : index
    %375 = vector.load %arg8[%c0_120, %c0_121] : memref<1x2xf32, #tpu.memory_space<vmem>>, vector<1x2xf32>
    %376 = vector.broadcast %375 : vector<1x2xf32> to vector<2x2xf32>
    %377 = arith.addf %374, %376 : vector<2x2xf32>
    %cst_122 = arith.constant dense<0xFF800000> : vector<2xf32>
    %378 = vector.multi_reduction <maximumf>, %377, %cst_122 [1] : vector<2x2xf32> to vector<2xf32>
    %379 = vector.shape_cast %378 : vector<2xf32> to vector<2x1xf32>
    %380 = vector.broadcast %379 : vector<2x1xf32> to vector<2x2xf32>
    %381 = arith.subf %377, %380 : vector<2x2xf32>
    %382 = math.exp %381 : vector<2x2xf32>
    %cst_123 = arith.constant dense<0.000000e+00> : vector<2xf32>
    %383 = vector.multi_reduction <add>, %382, %cst_123 [1] : vector<2x2xf32> to vector<2xf32>
    %384 = vector.shape_cast %383 : vector<2xf32> to vector<2x1xf32>
    %385 = vector.broadcast %384 : vector<2x1xf32> to vector<2x2xf32>
    %386 = arith.divf %382, %385 : vector<2x2xf32>
    %cst_124 = arith.constant 0.000000e+00 : f32
    %387 = vector.broadcast %cst_124 : f32 to vector<8x128xf32>
    %c0_125 = arith.constant 0 : index
    %c0_126 = arith.constant 0 : index
    %388 = vector.load %arg9[%c0_125, %c0_126] : memref<8x128xf32, #tpu.memory_space<vmem>>, vector<8x128xf32>
    tpu.vector_store %arg9[%c0_125, %c0_126], %387 {strides = array<i32>} : memref<8x128xf32, #tpu.memory_space<vmem>>, vector<8x128xf32>,
    %c0_127 = arith.constant 0 : index
    %c0_128 = arith.constant 0 : index
    %389 = vector.load %arg9[%c0_127, %c0_128] : memref<8x128xf32, #tpu.memory_space<vmem>>, vector<2x2xf32>
    tpu.vector_store %arg9[%c0_127, %c0_128], %386 {strides = array<i32>} : memref<8x128xf32, #tpu.memory_space<vmem>>, vector<2x2xf32>,
    return
  }
}

</mosaic_0001>

<llo_original>
// kernel: siamese_lstm_forward.1
$region0: #{siamese_lstm_forward.1}
  #allocation0 [shape = 'u32[]', space=smem, size = 0x4, offset = 0x4, fixed_abs, tag = 'smem constant byte address 0x4 - core index']
  #allocation1 [shape = 'u32[144,128]{1,0:T(1,128)}', space=vmem, size = 0x12000, scoped, tag = 'internal scratch']
  #allocation2 [shape = 'f32[64,256]{1,0:T(8,128)}', space=vmem, size = 0x10000, scoped, tag = 'scratch operand']
  #allocation3 [shape = 'f32[64,128]{1,0:T(8,128)}', space=vmem, size = 0x8000, scoped, tag = 'scratch operand']
  %s0 = inlined_call_operand.vmem [shape: f32[64,64], index: 0, kind: input, shape index: {}]
  %s1 = inlined_call_operand.vmem [shape: f32[64,256], index: 1, kind: input, shape index: {}]
  %s2 = inlined_call_operand.vmem [shape: f32[64,256], index: 2, kind: input, shape index: {}]
  %s3 = inlined_call_operand.vmem [shape: f32[1,256], index: 3, kind: input, shape index: {}]
  %s4 = inlined_call_operand.vmem [shape: f32[128,256], index: 4, kind: input, shape index: {}]
  %s5 = inlined_call_operand.vmem [shape: f32[64,256], index: 5, kind: input, shape index: {}]
  %s6 = inlined_call_operand.vmem [shape: f32[1,256], index: 6, kind: input, shape index: {}]
  %s7 = inlined_call_operand.vmem [shape: f32[2,2], index: 7, kind: input, shape index: {}]
  %s8 = inlined_call_operand.vmem [shape: f32[1,2], index: 8, kind: input, shape index: {}]
  %s9 = inlined_call_operand.vmem [shape: f32[8,128], index: 9, kind: output, shape index: {}]
  %s10 = sld [smem:[#allocation0]]
  $region46: #{siamese_lstm_forward.1} parent=0
    _
  %s12 = ssub.s32 1, %s10
  %s13 = scalar_select 0, %s12, %s10
  // Predicated region
  $region2: #{siamese_lstm_forward.1} parent=0 // pred_check
    _
  $region3: #{siamese_lstm_forward.1} parent=0 // pred_check_branch
    %15 = sbr.rel (0) target = $region5
  $region4: #{siamese_lstm_forward.1} parent=0 // pred_region
    _
  $region5: #{siamese_lstm_forward.1} parent=0 // pred_fallthru
    _
  // Predicated region
  $region6: #{siamese_lstm_forward.1} parent=0 // pred_check
    _
  $region7: #{siamese_lstm_forward.1} parent=0 // pred_check_branch
    %17 = sbr.rel (0) target = $region9
  $region8: #{siamese_lstm_forward.1} parent=0 // pred_region
    _
  $region9: #{siamese_lstm_forward.1} parent=0 // pred_fallthru
    _
  // Predicated region
  $region10: #{siamese_lstm_forward.1} parent=0 // pred_check
    _
  $region11: #{siamese_lstm_forward.1} parent=0 // pred_check_branch
    %19 = sbr.rel (0) target = $region13
  $region12: #{siamese_lstm_forward.1} parent=0 // pred_region
    _
  $region13: #{siamese_lstm_forward.1} parent=0 // pred_fallthru
    _
  // Predicated region
  $region14: #{siamese_lstm_forward.1} parent=0 // pred_check
    _
  $region15: #{siamese_lstm_forward.1} parent=0 // pred_check_branch
    %21 = sbr.rel (0) target = $region17
  $region16: #{siamese_lstm_forward.1} parent=0 // pred_region
    _
  $region17: #{siamese_lstm_forward.1} parent=0 // pred_fallthru
    _
  // Predicated region
  $region18: #{siamese_lstm_forward.1} parent=0 // pred_check
    _
  $region19: #{siamese_lstm_forward.1} parent=0 // pred_check_branch
    %23 = sbr.rel (0) target = $region21
  $region20: #{siamese_lstm_forward.1} parent=0 // pred_region
    _
  $region21: #{siamese_lstm_forward.1} parent=0 // pred_fallthru
    _
  // Predicated region
  $region22: #{siamese_lstm_forward.1} parent=0 // pred_check
    _
  $region23: #{siamese_lstm_forward.1} parent=0 // pred_check_branch
    %25 = sbr.rel (0) target = $region25
  $region24: #{siamese_lstm_forward.1} parent=0 // pred_region
    _
  $region25: #{siamese_lstm_forward.1} parent=0 // pred_fallthru
    _
  // Predicated region
  $region26: #{siamese_lstm_forward.1} parent=0 // pred_check
    _
  $region27: #{siamese_lstm_forward.1} parent=0 // pred_check_branch
    %27 = sbr.rel (0) target = $region29
  $region28: #{siamese_lstm_forward.1} parent=0 // pred_region
    _
  $region29: #{siamese_lstm_forward.1} parent=0 // pred_fallthru
    _
  // Predicated region
  $region30: #{siamese_lstm_forward.1} parent=0 // pred_check
    _
  $region31: #{siamese_lstm_forward.1} parent=0 // pred_check_branch
    %29 = sbr.rel (0) target = $region33
  $region32: #{siamese_lstm_forward.1} parent=0 // pred_region
    _
  $region33: #{siamese_lstm_forward.1} parent=0 // pred_fallthru
    _
  // Predicated region
  $region34: #{siamese_lstm_forward.1} parent=0 // pred_check
    _
  $region35: #{siamese_lstm_forward.1} parent=0 // pred_check_branch
    %31 = sbr.rel (0) target = $region37
  $region36: #{siamese_lstm_forward.1} parent=0 // pred_region
    _
  $region37: #{siamese_lstm_forward.1} parent=0 // pred_fallthru
    _
  %v32 = vld [vmem:[%s1] sm:$0xff]
  %v33 = vld [vmem:[%s1 + $0x8] sm:$0xff]
  %v34 = vld [vmem:[%s1 + $0x10] sm:$0xff]
  %v35 = vld [vmem:[%s1 + $0x18] sm:$0xff]
  %v36 = vld [vmem:[%s1 + $0x20] sm:$0xff]
  %v37 = vld [vmem:[%s1 + $0x28] sm:$0xff]
  %v38 = vld [vmem:[%s1 + $0x30] sm:$0xff]
  %v39 = vld [vmem:[%s1 + $0x38] sm:$0xff]
  %v40 = vld [vmem:[%s1 + $0x40] sm:$0xff]
  %v41 = vld [vmem:[%s1 + $0x48] sm:$0xff]
  %v42 = vld [vmem:[%s1 + $0x50] sm:$0xff]
  %v43 = vld [vmem:[%s1 + $0x58] sm:$0xff]
  %v44 = vld [vmem:[%s1 + $0x60] sm:$0xff]
  %v45 = vld [vmem:[%s1 + $0x68] sm:$0xff]
  %v46 = vld [vmem:[%s1 + $0x70] sm:$0xff]
  %v47 = vld [vmem:[%s1 + $0x78] sm:$0xff]
  %v48 = vld [vmem:[%s2] sm:$0xff]
  %v49 = vld [vmem:[%s2 + $0x8] sm:$0xff]
  %v50 = vld [vmem:[%s2 + $0x10] sm:$0xff]
  %v51 = vld [vmem:[%s2 + $0x18] sm:$0xff]
  %v52 = vld [vmem:[%s2 + $0x20] sm:$0xff]
  %v53 = vld [vmem:[%s2 + $0x28] sm:$0xff]
  %v54 = vld [vmem:[%s2 + $0x30] sm:$0xff]
  %v55 = vld [vmem:[%s2 + $0x38] sm:$0xff]
  %v56 = vld [vmem:[%s2 + $0x40] sm:$0xff]
  %v57 = vld [vmem:[%s2 + $0x48] sm:$0xff]
  %v58 = vld [vmem:[%s2 + $0x50] sm:$0xff]
  %v59 = vld [vmem:[%s2 + $0x58] sm:$0xff]
  %v60 = vld [vmem:[%s2 + $0x60] sm:$0xff]
  %v61 = vld [vmem:[%s2 + $0x68] sm:$0xff]
  %v62 = vld [vmem:[%s2 + $0x70] sm:$0xff]
  %v63 = vld [vmem:[%s2 + $0x78] sm:$0xff]
  %v64 = vld [vmem:[%s3] sm:$0x3]
  %v65 = vld [vmem:[%s0] sm:$0xff]
  %v66 = vld [vmem:[%s0 + $0x8] sm:$0xff]
  %v67 = vld [vmem:[%s0 + $0x10] sm:$0xff]
  %v68 = vld [vmem:[%s0 + $0x18] sm:$0xff]
  %v69 = vld [vmem:[%s0 + $0x20] sm:$0xff]
  %v70 = vld [vmem:[%s0 + $0x28] sm:$0xff]
  %v71 = vld [vmem:[%s0 + $0x30] sm:$0xff]
  %v72 = vld [vmem:[%s0 + $0x38] sm:$0xff]
  %v74 = vlaneseq
  %v75 = vshrl.u32 %v74, 7
  %v76 = vsub.s32 0, %v75
  %v77 = vrot.slane %v64, %v76
  %v78 = vlaneseq
  %v79 = vshrl.u32 %v78, 7
  %v80 = vsub.s32 1, %v79
  %v81 = vrot.slane %v64, %v80
  %vm84 = vcmask 523264
  %v86 = vsel %vm84, %v65, 0
  %v89 = vsel %vm84, %v66, 0
  %v92 = vsel %vm84, %v67, 0
  %v95 = vsel %vm84, %v68, 0
  %v98 = vsel %vm84, %v69, 0
  %v101 = vsel %vm84, %v70, 0
  %v104 = vsel %vm84, %v71, 0
  %v107 = vsel %vm84, %v72, 0
  %109 = vmatprep.subr.mxu0 0.0
  %110 = vmatpush1.msra.mxu0 0.0
  %111 = vmatprep.subr.mxu0 0.0
  %112 = vmatpush1.msra.mxu0 0.0
  %113 = vmatprep.subr.mxu0 0.0
  %114 = vmatpush1.msra.mxu0 0.0
  %115 = vmatprep.subr.mxu0 0.0
  %116 = vmatpush1.msra.mxu0 0.0
  %117 = vmatprep.subr.mxu0 0.0
  %118 = vmatpush1.msra.mxu0 0.0
  %119 = vmatprep.subr.mxu0 0.0
  %120 = vmatpush1.msra.mxu0 0.0
  %121 = vmatprep.subr.mxu0 0.0
  %122 = vmatpush1.msra.mxu0 0.0
  %123 = vmatprep.subr.mxu0 0.0
  %124 = vmatpush1.msra.mxu0 0.0
  %125 = vmatprep.subr.mxu0 %v47
  %126 = vmatpush1.msra.mxu0 %v46
  %127 = vmatprep.subr.mxu0 %v45
  %128 = vmatpush1.msra.mxu0 %v44
  %129 = vmatprep.subr.mxu0 %v43
  %130 = vmatpush1.msra.mxu0 %v42
  %131 = vmatprep.subr.mxu0 %v41
  %132 = vmatpush1.msra.mxu0 %v40
  %133 = vmatprep.subr.mxu0 %v39
  %134 = vmatpush1.msra.mxu0 %v38
  %135 = vmatprep.subr.mxu0 %v37
  %136 = vmatpush1.msra.mxu0 %v36
  %137 = vmatprep.subr.mxu0 %v35
  %138 = vmatpush1.msra.mxu0 %v34
  %139 = vmatprep.subr.mxu0 %v33
  %140 = vmatpush1.msra.mxu0 %v32
  %141 = vmatprep.subr.mxu0 0.0
  %142 = vmatpush2.msra.mxu0 0.0
  %143 = vmatprep.subr.mxu0 0.0
  %144 = vmatpush2.msra.mxu0 0.0
  %145 = vmatprep.subr.mxu0 0.0
  %146 = vmatpush2.msra.mxu0 0.0
  %147 = vmatprep.subr.mxu0 0.0
  %148 = vmatpush2.msra.mxu0 0.0
  %149 = vmatprep.subr.mxu0 0.0
  %150 = vmatpush2.msra.mxu0 0.0
  %151 = vmatprep.subr.mxu0 0.0
  %152 = vmatpush2.msra.mxu0 0.0
  %153 = vmatprep.subr.mxu0 0.0
  %154 = vmatpush2.msra.mxu0 0.0
  %155 = vmatprep.subr.mxu0 0.0
  %156 = vmatpush2.msra.mxu0 0.0
  %157 = vmatprep.subr.mxu0 0.0
  %158 = vmatpush2.msra.mxu0 0.0
  %159 = vmatprep.subr.mxu0 0.0
  %160 = vmatpush2.msra.mxu0 0.0
  %161 = vmatprep.subr.mxu0 0.0
  %162 = vmatpush2.msra.mxu0 0.0
  %163 = vmatprep.subr.mxu0 0.0
  %164 = vmatpush2.msra.mxu0 0.0
  %165 = vmatprep.subr.mxu0 0.0
  %166 = vmatpush2.msra.mxu0 0.0
  %167 = vmatprep.subr.mxu0 0.0
  %168 = vmatpush2.msra.mxu0 0.0
  %169 = vmatprep.subr.mxu0 0.0
  %170 = vmatpush2.msra.mxu0 0.0
  %171 = vmatprep.subr.mxu0 0.0
  %172 = vmatpush2.msra.mxu0 0.0
  %173 = vmatprep.mubr.f32.mxu0 0.0
  %174 = vmatmul.mubr.f32.gmra.mxu0 %v86
  %v175 = vpop.f32.mrf.mxu0
  %v176 = vadd.f32 %v77, %v175
  %v177 = vpop.f32.mrf.mxu0
  %v178 = vadd.f32 %v81, %v177
  %179 = vmatprep.mubr.f32.mxu0 0.0
  %180 = vmatmul.mubr.f32.gmra.mxu0 %v89
  %v181 = vpop.f32.mrf.mxu0
  %v182 = vadd.f32 %v77, %v181
  %v183 = vpop.f32.mrf.mxu0
  %v184 = vadd.f32 %v81, %v183
  %185 = vmatprep.mubr.f32.mxu0 0.0
  %186 = vmatmul.mubr.f32.gmra.mxu0 %v92
  %v187 = vpop.f32.mrf.mxu0
  %v188 = vadd.f32 %v77, %v187
  %v189 = vpop.f32.mrf.mxu0
  %v190 = vadd.f32 %v81, %v189
  %191 = vmatprep.mubr.f32.mxu0 0.0
  %192 = vmatmul.mubr.f32.gmra.mxu0 %v95
  %v193 = vpop.f32.mrf.mxu0
  %v194 = vadd.f32 %v77, %v193
  %v195 = vpop.f32.mrf.mxu0
  %v196 = vadd.f32 %v81, %v195
  %197 = vmatprep.mubr.f32.mxu0 0.0
  %198 = vmatmul.mubr.f32.gmra.mxu0 %v98
  %v199 = vpop.f32.mrf.mxu0
  %v200 = vadd.f32 %v77, %v199
  %v201 = vpop.f32.mrf.mxu0
  %v202 = vadd.f32 %v81, %v201
  %203 = vmatprep.mubr.f32.mxu0 0.0
  %204 = vmatmul.mubr.f32.gmra.mxu0 %v101
  %v205 = vpop.f32.mrf.mxu0
  %v206 = vadd.f32 %v77, %v205
  %v207 = vpop.f32.mrf.mxu0
  %v208 = vadd.f32 %v81, %v207
  %209 = vmatprep.mubr.f32.mxu0 0.0
  %210 = vmatmul.mubr.f32.gmra.mxu0 %v104
  %v211 = vpop.f32.mrf.mxu0
  %v212 = vadd.f32 %v77, %v211
  %v213 = vpop.f32.mrf.mxu0
  %v214 = vadd.f32 %v81, %v213
  %215 = vmatprep.mubr.f32.mxu0 0.0
  %216 = vmatmul.mubr.f32.gmra.mxu0 %v107
  %v217 = vpop.f32.mrf.mxu0
  %v218 = vadd.f32 %v77, %v217
  %v219 = vpop.f32.mrf.mxu0
  %v220 = vadd.f32 %v81, %v219
  %221 = vdwg.mxu0
  %222 = vst [vmem:[#allocation2] sm:$0xff] %v176
  %223 = vst [vmem:[#allocation2 + $0x8] sm:$0xff] %v178
  %224 = vst [vmem:[#allocation2 + $0x10] sm:$0xff] %v182
  %225 = vst [vmem:[#allocation2 + $0x18] sm:$0xff] %v184
  %226 = vst [vmem:[#allocation2 + $0x20] sm:$0xff] %v188
  %227 = vst [vmem:[#allocation2 + $0x28] sm:$0xff] %v190
  %228 = vst [vmem:[#allocation2 + $0x30] sm:$0xff] %v194
  %229 = vst [vmem:[#allocation2 + $0x38] sm:$0xff] %v196
  %230 = vst [vmem:[#allocation2 + $0x40] sm:$0xff] %v200
  %231 = vst [vmem:[#allocation2 + $0x48] sm:$0xff] %v202
  %232 = vst [vmem:[#allocation2 + $0x50] sm:$0xff] %v206
  %233 = vst [vmem:[#allocation2 + $0x58] sm:$0xff] %v208
  %234 = vst [vmem:[#allocation2 + $0x60] sm:$0xff] %v212
  %235 = vst [vmem:[#allocation2 + $0x68] sm:$0xff] %v214
  %236 = vst [vmem:[#allocation2 + $0x70] sm:$0xff] %v218
  %237 = vst [vmem:[#allocation2 + $0x78] sm:$0xff] %v220
  %v238 = vld [vmem:[#allocation2] sm:$0xff]
  %v239 = vld [vmem:[#allocation2 + $0x8] sm:$0xff]
  %v241 = vsel %vm84, 0.0, 0
  %243 = vmatprep.subr.mxu0 0.0
  %244 = vmatpush1.msra.mxu0 0.0
  %245 = vmatprep.subr.mxu0 0.0
  %246 = vmatpush1.msra.mxu0 0.0
  %247 = vmatprep.subr.mxu0 0.0
  %248 = vmatpush1.msra.mxu0 0.0
  %249 = vmatprep.subr.mxu0 0.0
  %250 = vmatpush1.msra.mxu0 0.0
  %251 = vmatprep.subr.mxu0 0.0
  %252 = vmatpush1.msra.mxu0 0.0
  %253 = vmatprep.subr.mxu0 0.0
  %254 = vmatpush1.msra.mxu0 0.0
  %255 = vmatprep.subr.mxu0 0.0
  %256 = vmatpush1.msra.mxu0 0.0
  %257 = vmatprep.subr.mxu0 0.0
  %258 = vmatpush1.msra.mxu0 0.0
  %259 = vmatprep.subr.mxu0 %v63
  %260 = vmatpush1.msra.mxu0 %v62
  %261 = vmatprep.subr.mxu0 %v61
  %262 = vmatpush1.msra.mxu0 %v60
  %263 = vmatprep.subr.mxu0 %v59
  %264 = vmatpush1.msra.mxu0 %v58
  %265 = vmatprep.subr.mxu0 %v57
  %266 = vmatpush1.msra.mxu0 %v56
  %267 = vmatprep.subr.mxu0 %v55
  %268 = vmatpush1.msra.mxu0 %v54
  %269 = vmatprep.subr.mxu0 %v53
  %270 = vmatpush1.msra.mxu0 %v52
  %271 = vmatprep.subr.mxu0 %v51
  %272 = vmatpush1.msra.mxu0 %v50
  %273 = vmatprep.subr.mxu0 %v49
  %274 = vmatpush1.msra.mxu0 %v48
  %275 = vmatprep.subr.mxu0 0.0
  %276 = vmatpush2.msra.mxu0 0.0
  %277 = vmatprep.subr.mxu0 0.0
  %278 = vmatpush2.msra.mxu0 0.0
  %279 = vmatprep.subr.mxu0 0.0
  %280 = vmatpush2.msra.mxu0 0.0
  %281 = vmatprep.subr.mxu0 0.0
  %282 = vmatpush2.msra.mxu0 0.0
  %283 = vmatprep.subr.mxu0 0.0
  %284 = vmatpush2.msra.mxu0 0.0
  %285 = vmatprep.subr.mxu0 0.0
  %286 = vmatpush2.msra.mxu0 0.0
  %287 = vmatprep.subr.mxu0 0.0
  %288 = vmatpush2.msra.mxu0 0.0
  %289 = vmatprep.subr.mxu0 0.0
  %290 = vmatpush2.msra.mxu0 0.0
  %291 = vmatprep.subr.mxu0 0.0
  %292 = vmatpush2.msra.mxu0 0.0
  %293 = vmatprep.subr.mxu0 0.0
  %294 = vmatpush2.msra.mxu0 0.0
  %295 = vmatprep.subr.mxu0 0.0
  %296 = vmatpush2.msra.mxu0 0.0
  %297 = vmatprep.subr.mxu0 0.0
  %298 = vmatpush2.msra.mxu0 0.0
  %299 = vmatprep.subr.mxu0 0.0
  %300 = vmatpush2.msra.mxu0 0.0
  %301 = vmatprep.subr.mxu0 0.0
  %302 = vmatpush2.msra.mxu0 0.0
  %303 = vmatprep.subr.mxu0 0.0
  %304 = vmatpush2.msra.mxu0 0.0
  %305 = vmatprep.subr.mxu0 0.0
  %306 = vmatpush2.msra.mxu0 0.0
  %307 = vmatprep.mubr.f32.mxu0 0.0
  %308 = vmatmul.mubr.f32.gmra.mxu0 %v241
  %v309 = vpop.f32.mrf.mxu0
  %v310 = vadd.f32 0.0, %v309
  %v311 = vpop.f32.mrf.mxu0
  %v312 = vadd.f32 0.0, %v311
  %313 = vdwg.mxu0
  %v314 = vadd.f32 %v238, %v310
  %v315 = vadd.f32 %v239, %v312
  %v316 = vxor.u32 %v314, 2147483648
  %v317 = vxor.u32 %v315, 2147483648
  %v318 = vmul.f32 %v316, 1.442695
  %v319 = vpow.pop %v318
  %v320 = vmul.f32 %v317, 1.442695
  %v321 = vpow.pop %v320
  %v322 = vadd.f32 %v319, 1.0
  %v323 = vadd.f32 %v321, 1.0
  %v324 = vrcp.pop %v322
  %v325 = vmul.f32 1.0, %v324
  %v326 = vrcp.pop %v323
  %v327 = vmul.f32 1.0, %v326
  %v328 = vtanh.pop %v315
  %v329 = vmul.f32 %v325, 0.0
  %331 = vrot.lane.b32.xlu0 %v328, 64
  %v332 = vpop.permute.xlu0 %331
  %v334 = vmul.f32 %v325, %v332
  %336 = vrot.lane.b32.xlu0 %v334, 64
  %v337 = vpop.permute.xlu0 %336
  %v339 = vadd.f32 %v329, %v337
  %v340 = vtanh.pop %v339
  %342 = vrot.lane.b32.xlu0 %v340, 64
  %v343 = vpop.permute.xlu0 %342
  %v345 = vmul.f32 %v327, %v343
  %346 = vst.msk [vmem:[#allocation3] sm:$0xff] %vm84, %v345
  %348 = vrot.lane.b32.xlu0 %v345, 64
  %v349 = vpop.permute.xlu0 %348
  %vm351 = vcmask 1048064
  %352 = vst.msk [vmem:[#allocation3 + $0x38] sm:$0xff] %vm351, %v349
  %v353 = vld [vmem:[#allocation2 + $0x10] sm:$0xff]
  %v354 = vld [vmem:[#allocation2 + $0x18] sm:$0xff]
  %v355 = vsel %vm84, %v345, 0
  %357 = vmatprep.subr.mxu0 0.0
  %358 = vmatpush1.msra.mxu0 0.0
  %359 = vmatprep.subr.mxu0 0.0
  %360 = vmatpush1.msra.mxu0 0.0
  %361 = vmatprep.subr.mxu0 0.0
  %362 = vmatpush1.msra.mxu0 0.0
  %363 = vmatprep.subr.mxu0 0.0
  %364 = vmatpush1.msra.mxu0 0.0
  %365 = vmatprep.subr.mxu0 0.0
  %366 = vmatpush1.msra.mxu0 0.0
  %367 = vmatprep.subr.mxu0 0.0
  %368 = vmatpush1.msra.mxu0 0.0
  %369 = vmatprep.subr.mxu0 0.0
  %370 = vmatpush1.msra.mxu0 0.0
  %371 = vmatprep.subr.mxu0 0.0
  %372 = vmatpush1.msra.mxu0 0.0
  %373 = vmatprep.subr.mxu0 %v63
  %374 = vmatpush1.msra.mxu0 %v62
  %375 = vmatprep.subr.mxu0 %v61
  %376 = vmatpush1.msra.mxu0 %v60
  %377 = vmatprep.subr.mxu0 %v59
  %378 = vmatpush1.msra.mxu0 %v58
  %379 = vmatprep.subr.mxu0 %v57
  %380 = vmatpush1.msra.mxu0 %v56
  %381 = vmatprep.subr.mxu0 %v55
  %382 = vmatpush1.msra.mxu0 %v54
  %383 = vmatprep.subr.mxu0 %v53
  %384 = vmatpush1.msra.mxu0 %v52
  %385 = vmatprep.subr.mxu0 %v51
  %386 = vmatpush1.msra.mxu0 %v50
  %387 = vmatprep.subr.mxu0 %v49
  %388 = vmatpush1.msra.mxu0 %v48
  %389 = vmatprep.subr.mxu0 0.0
  %390 = vmatpush2.msra.mxu0 0.0
  %391 = vmatprep.subr.mxu0 0.0
  %392 = vmatpush2.msra.mxu0 0.0
  %393 = vmatprep.subr.mxu0 0.0
  %394 = vmatpush2.msra.mxu0 0.0
  %395 = vmatprep.subr.mxu0 0.0
  %396 = vmatpush2.msra.mxu0 0.0
  %397 = vmatprep.subr.mxu0 0.0
  %398 = vmatpush2.msra.mxu0 0.0
  %399 = vmatprep.subr.mxu0 0.0
  %400 = vmatpush2.msra.mxu0 0.0
  %401 = vmatprep.subr.mxu0 0.0
  %402 = vmatpush2.msra.mxu0 0.0
  %403 = vmatprep.subr.mxu0 0.0
  %404 = vmatpush2.msra.mxu0 0.0
  %405 = vmatprep.subr.mxu0 0.0
  %406 = vmatpush2.msra.mxu0 0.0
  %407 = vmatprep.subr.mxu0 0.0
  %408 = vmatpush2.msra.mxu0 0.0
  %409 = vmatprep.subr.mxu0 0.0
  %410 = vmatpush2.msra.mxu0 0.0
  %411 = vmatprep.subr.mxu0 0.0
  %412 = vmatpush2.msra.mxu0 0.0
  %413 = vmatprep.subr.mxu0 0.0
  %414 = vmatpush2.msra.mxu0 0.0
  %415 = vmatprep.subr.mxu0 0.0
  %416 = vmatpush2.msra.mxu0 0.0
  %417 = vmatprep.subr.mxu0 0.0
  %418 = vmatpush2.msra.mxu0 0.0
  %419 = vmatprep.subr.mxu0 0.0
  %420 = vmatpush2.msra.mxu0 0.0
  %421 = vmatprep.mubr.f32.mxu0 0.0
  %422 = vmatmul.mubr.f32.gmra.mxu0 %v355
  %v423 = vpop.f32.mrf.mxu0
  %v424 = vadd.f32 0.0, %v423
  %v425 = vpop.f32.mrf.mxu0
  %v426 = vadd.f32 0.0, %v425
  %427 = vdwg.mxu0
  %v428 = vadd.f32 %v353, %v424
  %v429 = vadd.f32 %v354, %v426
  %v430 = vxor.u32 %v428, 2147483648
  %v431 = vxor.u32 %v429, 2147483648
  %v432 = vmul.f32 %v430, 1.442695
  %v433 = vpow.pop %v432
  %v434 = vmul.f32 %v431, 1.442695
  %v435 = vpow.pop %v434
  %v436 = vadd.f32 %v433, 1.0
  %v437 = vadd.f32 %v435, 1.0
  %v438 = vrcp.pop %v436
  %v439 = vmul.f32 1.0, %v438
  %v440 = vrcp.pop %v437
  %v441 = vmul.f32 1.0, %v440
  %v442 = vtanh.pop %v429
  %v443 = vmul.f32 %v439, %v339
  %445 = vrot.lane.b32.xlu0 %v442, 64
  %v446 = vpop.permute.xlu0 %445
  %v448 = vmul.f32 %v439, %v446
  %450 = vrot.lane.b32.xlu0 %v448, 64
  %v451 = vpop.permute.xlu0 %450
  %v453 = vadd.f32 %v443, %v451
  %v454 = vtanh.pop %v453
  %456 = vrot.lane.b32.xlu0 %v454, 64
  %v457 = vpop.permute.xlu0 %456
  %v459 = vmul.f32 %v441, %v457
  %460 = vst.msk [vmem:[#allocation3 + $0x8] sm:$0xff] %vm84, %v459
  %462 = vrot.lane.b32.xlu0 %v459, 64
  %v463 = vpop.permute.xlu0 %462
  %465 = vst.msk [vmem:[#allocation3 + $0x30] sm:$0xff] %vm351, %v463
  %v466 = vld [vmem:[#allocation2 + $0x20] sm:$0xff]
  %v467 = vld [vmem:[#allocation2 + $0x28] sm:$0xff]
  %v468 = vsel %vm84, %v459, 0
  %470 = vmatprep.subr.mxu0 0.0
  %471 = vmatpush1.msra.mxu0 0.0
  %472 = vmatprep.subr.mxu0 0.0
  %473 = vmatpush1.msra.mxu0 0.0
  %474 = vmatprep.subr.mxu0 0.0
  %475 = vmatpush1.msra.mxu0 0.0
  %476 = vmatprep.subr.mxu0 0.0
  %477 = vmatpush1.msra.mxu0 0.0
  %478 = vmatprep.subr.mxu0 0.0
  %479 = vmatpush1.msra.mxu0 0.0
  %480 = vmatprep.subr.mxu0 0.0
  %481 = vmatpush1.msra.mxu0 0.0
  %482 = vmatprep.subr.mxu0 0.0
  %483 = vmatpush1.msra.mxu0 0.0
  %484 = vmatprep.subr.mxu0 0.0
  %485 = vmatpush1.msra.mxu0 0.0
  %486 = vmatprep.subr.mxu0 %v63
  %487 = vmatpush1.msra.mxu0 %v62
  %488 = vmatprep.subr.mxu0 %v61
  %489 = vmatpush1.msra.mxu0 %v60
  %490 = vmatprep.subr.mxu0 %v59
  %491 = vmatpush1.msra.mxu0 %v58
  %492 = vmatprep.subr.mxu0 %v57
  %493 = vmatpush1.msra.mxu0 %v56
  %494 = vmatprep.subr.mxu0 %v55
  %495 = vmatpush1.msra.mxu0 %v54
  %496 = vmatprep.subr.mxu0 %v53
  %497 = vmatpush1.msra.mxu0 %v52
  %498 = vmatprep.subr.mxu0 %v51
  %499 = vmatpush1.msra.mxu0 %v50
  %500 = vmatprep.subr.mxu0 %v49
  %501 = vmatpush1.msra.mxu0 %v48
  %502 = vmatprep.subr.mxu0 0.0
  %503 = vmatpush2.msra.mxu0 0.0
  %504 = vmatprep.subr.mxu0 0.0
  %505 = vmatpush2.msra.mxu0 0.0
  %506 = vmatprep.subr.mxu0 0.0
  %507 = vmatpush2.msra.mxu0 0.0
  %508 = vmatprep.subr.mxu0 0.0
  %509 = vmatpush2.msra.mxu0 0.0
  %510 = vmatprep.subr.mxu0 0.0
  %511 = vmatpush2.msra.mxu0 0.0
  %512 = vmatprep.subr.mxu0 0.0
  %513 = vmatpush2.msra.mxu0 0.0
  %514 = vmatprep.subr.mxu0 0.0
  %515 = vmatpush2.msra.mxu0 0.0
  %516 = vmatprep.subr.mxu0 0.0
  %517 = vmatpush2.msra.mxu0 0.0
  %518 = vmatprep.subr.mxu0 0.0
  %519 = vmatpush2.msra.mxu0 0.0
  %520 = vmatprep.subr.mxu0 0.0
  %521 = vmatpush2.msra.mxu0 0.0
  %522 = vmatprep.subr.mxu0 0.0
  %523 = vmatpush2.msra.mxu0 0.0
  %524 = vmatprep.subr.mxu0 0.0
  %525 = vmatpush2.msra.mxu0 0.0
  %526 = vmatprep.subr.mxu0 0.0
  %527 = vmatpush2.msra.mxu0 0.0
  %528 = vmatprep.subr.mxu0 0.0
  %529 = vmatpush2.msra.mxu0 0.0
  %530 = vmatprep.subr.mxu0 0.0
  %531 = vmatpush2.msra.mxu0 0.0
  %532 = vmatprep.subr.mxu0 0.0
  %533 = vmatpush2.msra.mxu0 0.0
  %534 = vmatprep.mubr.f32.mxu0 0.0
  %535 = vmatmul.mubr.f32.gmra.mxu0 %v468
  %v536 = vpop.f32.mrf.mxu0
  %v537 = vadd.f32 0.0, %v536
  %v538 = vpop.f32.mrf.mxu0
  %v539 = vadd.f32 0.0, %v538
  %540 = vdwg.mxu0
  %v541 = vadd.f32 %v466, %v537
  %v542 = vadd.f32 %v467, %v539
  %v543 = vxor.u32 %v541, 2147483648
  %v544 = vxor.u32 %v542, 2147483648
  %v545 = vmul.f32 %v543, 1.442695
  %v546 = vpow.pop %v545
  %v547 = vmul.f32 %v544, 1.442695
  %v548 = vpow.pop %v547
  %v549 = vadd.f32 %v546, 1.0
  %v550 = vadd.f32 %v548, 1.0
  %v551 = vrcp.pop %v549
  %v552 = vmul.f32 1.0, %v551
  %v553 = vrcp.pop %v550
  %v554 = vmul.f32 1.0, %v553
  %v555 = vtanh.pop %v542
  %v556 = vmul.f32 %v552, %v453
  %558 = vrot.lane.b32.xlu0 %v555, 64
  %v559 = vpop.permute.xlu0 %558
  %v561 = vmul.f32 %v552, %v559
  %563 = vrot.lane.b32.xlu0 %v561, 64
  %v564 = vpop.permute.xlu0 %563
  %v566 = vadd.f32 %v556, %v564
  %v567 = vtanh.pop %v566
  %569 = vrot.lane.b32.xlu0 %v567, 64
  %v570 = vpop.permute.xlu0 %569
  %v572 = vmul.f32 %v554, %v570
  %573 = vst.msk [vmem:[#allocation3 + $0x10] sm:$0xff] %vm84, %v572
  %575 = vrot.lane.b32.xlu0 %v572, 64
  %v576 = vpop.permute.xlu0 %575
  %578 = vst.msk [vmem:[#allocation3 + $0x28] sm:$0xff] %vm351, %v576
  %v579 = vld [vmem:[#allocation2 + $0x30] sm:$0xff]
  %v580 = vld [vmem:[#allocation2 + $0x38] sm:$0xff]
  %v581 = vsel %vm84, %v572, 0
  %583 = vmatprep.subr.mxu0 0.0
  %584 = vmatpush1.msra.mxu0 0.0
  %585 = vmatprep.subr.mxu0 0.0
  %586 = vmatpush1.msra.mxu0 0.0
  %587 = vmatprep.subr.mxu0 0.0
  %588 = vmatpush1.msra.mxu0 0.0
  %589 = vmatprep.subr.mxu0 0.0
  %590 = vmatpush1.msra.mxu0 0.0
  %591 = vmatprep.subr.mxu0 0.0
  %592 = vmatpush1.msra.mxu0 0.0
  %593 = vmatprep.subr.mxu0 0.0
  %594 = vmatpush1.msra.mxu0 0.0
  %595 = vmatprep.subr.mxu0 0.0
  %596 = vmatpush1.msra.mxu0 0.0
  %597 = vmatprep.subr.mxu0 0.0
  %598 = vmatpush1.msra.mxu0 0.0
  %599 = vmatprep.subr.mxu0 %v63
  %600 = vmatpush1.msra.mxu0 %v62
  %601 = vmatprep.subr.mxu0 %v61
  %602 = vmatpush1.msra.mxu0 %v60
  %603 = vmatprep.subr.mxu0 %v59
  %604 = vmatpush1.msra.mxu0 %v58
  %605 = vmatprep.subr.mxu0 %v57
  %606 = vmatpush1.msra.mxu0 %v56
  %607 = vmatprep.subr.mxu0 %v55
  %608 = vmatpush1.msra.mxu0 %v54
  %609 = vmatprep.subr.mxu0 %v53
  %610 = vmatpush1.msra.mxu0 %v52
  %611 = vmatprep.subr.mxu0 %v51
  %612 = vmatpush1.msra.mxu0 %v50
  %613 = vmatprep.subr.mxu0 %v49
  %614 = vmatpush1.msra.mxu0 %v48
  %615 = vmatprep.subr.mxu0 0.0
  %616 = vmatpush2.msra.mxu0 0.0
  %617 = vmatprep.subr.mxu0 0.0
  %618 = vmatpush2.msra.mxu0 0.0
  %619 = vmatprep.subr.mxu0 0.0
  %620 = vmatpush2.msra.mxu0 0.0
  %621 = vmatprep.subr.mxu0 0.0
  %622 = vmatpush2.msra.mxu0 0.0
  %623 = vmatprep.subr.mxu0 0.0
  %624 = vmatpush2.msra.mxu0 0.0
  %625 = vmatprep.subr.mxu0 0.0
  %626 = vmatpush2.msra.mxu0 0.0
  %627 = vmatprep.subr.mxu0 0.0
  %628 = vmatpush2.msra.mxu0 0.0
  %629 = vmatprep.subr.mxu0 0.0
  %630 = vmatpush2.msra.mxu0 0.0
  %631 = vmatprep.subr.mxu0 0.0
  %632 = vmatpush2.msra.mxu0 0.0
  %633 = vmatprep.subr.mxu0 0.0
  %634 = vmatpush2.msra.mxu0 0.0
  %635 = vmatprep.subr.mxu0 0.0
  %636 = vmatpush2.msra.mxu0 0.0
  %637 = vmatprep.subr.mxu0 0.0
  %638 = vmatpush2.msra.mxu0 0.0
  %639 = vmatprep.subr.mxu0 0.0
  %640 = vmatpush2.msra.mxu0 0.0
  %641 = vmatprep.subr.mxu0 0.0
  %642 = vmatpush2.msra.mxu0 0.0
  %643 = vmatprep.subr.mxu0 0.0
  %644 = vmatpush2.msra.mxu0 0.0
  %645 = vmatprep.subr.mxu0 0.0
  %646 = vmatpush2.msra.mxu0 0.0
  %647 = vmatprep.mubr.f32.mxu0 0.0
  %648 = vmatmul.mubr.f32.gmra.mxu0 %v581
  %v649 = vpop.f32.mrf.mxu0
  %v650 = vadd.f32 0.0, %v649
  %v651 = vpop.f32.mrf.mxu0
  %v652 = vadd.f32 0.0, %v651
  %653 = vdwg.mxu0
  %v654 = vadd.f32 %v579, %v650
  %v655 = vadd.f32 %v580, %v652
  %v656 = vxor.u32 %v654, 2147483648
  %v657 = vxor.u32 %v655, 2147483648
  %v658 = vmul.f32 %v656, 1.442695
  %v659 = vpow.pop %v658
  %v660 = vmul.f32 %v657, 1.442695
  %v661 = vpow.pop %v660
  %v662 = vadd.f32 %v659, 1.0
  %v663 = vadd.f32 %v661, 1.0
  %v664 = vrcp.pop %v662
  %v665 = vmul.f32 1.0, %v664
  %v666 = vrcp.pop %v663
  %v667 = vmul.f32 1.0, %v666
  %v668 = vtanh.pop %v655
  %v669 = vmul.f32 %v665, %v566
  %671 = vrot.lane.b32.xlu0 %v668, 64
  %v672 = vpop.permute.xlu0 %671
  %v674 = vmul.f32 %v665, %v672
  %676 = vrot.lane.b32.xlu0 %v674, 64
  %v677 = vpop.permute.xlu0 %676
  %v679 = vadd.f32 %v669, %v677
  %v680 = vtanh.pop %v679
  %682 = vrot.lane.b32.xlu0 %v680, 64
  %v683 = vpop.permute.xlu0 %682
  %v685 = vmul.f32 %v667, %v683
  %686 = vst.msk [vmem:[#allocation3 + $0x18] sm:$0xff] %vm84, %v685
  %688 = vrot.lane.b32.xlu0 %v685, 64
  %v689 = vpop.permute.xlu0 %688
  %691 = vst.msk [vmem:[#allocation3 + $0x20] sm:$0xff] %vm351, %v689
  %v692 = vld [vmem:[#allocation2 + $0x40] sm:$0xff]
  %v693 = vld [vmem:[#allocation2 + $0x48] sm:$0xff]
  %v694 = vsel %vm84, %v685, 0
  %696 = vmatprep.subr.mxu0 0.0
  %697 = vmatpush1.msra.mxu0 0.0
  %698 = vmatprep.subr.mxu0 0.0
  %699 = vmatpush1.msra.mxu0 0.0
  %700 = vmatprep.subr.mxu0 0.0
  %701 = vmatpush1.msra.mxu0 0.0
  %702 = vmatprep.subr.mxu0 0.0
  %703 = vmatpush1.msra.mxu0 0.0
  %704 = vmatprep.subr.mxu0 0.0
  %705 = vmatpush1.msra.mxu0 0.0
  %706 = vmatprep.subr.mxu0 0.0
  %707 = vmatpush1.msra.mxu0 0.0
  %708 = vmatprep.subr.mxu0 0.0
  %709 = vmatpush1.msra.mxu0 0.0
  %710 = vmatprep.subr.mxu0 0.0
  %711 = vmatpush1.msra.mxu0 0.0
  %712 = vmatprep.subr.mxu0 %v63
  %713 = vmatpush1.msra.mxu0 %v62
  %714 = vmatprep.subr.mxu0 %v61
  %715 = vmatpush1.msra.mxu0 %v60
  %716 = vmatprep.subr.mxu0 %v59
  %717 = vmatpush1.msra.mxu0 %v58
  %718 = vmatprep.subr.mxu0 %v57
  %719 = vmatpush1.msra.mxu0 %v56
  %720 = vmatprep.subr.mxu0 %v55
  %721 = vmatpush1.msra.mxu0 %v54
  %722 = vmatprep.subr.mxu0 %v53
  %723 = vmatpush1.msra.mxu0 %v52
  %724 = vmatprep.subr.mxu0 %v51
  %725 = vmatpush1.msra.mxu0 %v50
  %726 = vmatprep.subr.mxu0 %v49
  %727 = vmatpush1.msra.mxu0 %v48
  %728 = vmatprep.subr.mxu0 0.0
  %729 = vmatpush2.msra.mxu0 0.0
  %730 = vmatprep.subr.mxu0 0.0
  %731 = vmatpush2.msra.mxu0 0.0
  %732 = vmatprep.subr.mxu0 0.0
  %733 = vmatpush2.msra.mxu0 0.0
  %734 = vmatprep.subr.mxu0 0.0
  %735 = vmatpush2.msra.mxu0 0.0
  %736 = vmatprep.subr.mxu0 0.0
  %737 = vmatpush2.msra.mxu0 0.0
  %738 = vmatprep.subr.mxu0 0.0
  %739 = vmatpush2.msra.mxu0 0.0
  %740 = vmatprep.subr.mxu0 0.0
  %741 = vmatpush2.msra.mxu0 0.0
  %742 = vmatprep.subr.mxu0 0.0
  %743 = vmatpush2.msra.mxu0 0.0
  %744 = vmatprep.subr.mxu0 0.0
  %745 = vmatpush2.msra.mxu0 0.0
  %746 = vmatprep.subr.mxu0 0.0
  %747 = vmatpush2.msra.mxu0 0.0
  %748 = vmatprep.subr.mxu0 0.0
  %749 = vmatpush2.msra.mxu0 0.0
  %750 = vmatprep.subr.mxu0 0.0
  %751 = vmatpush2.msra.mxu0 0.0
  %752 = vmatprep.subr.mxu0 0.0
  %753 = vmatpush2.msra.mxu0 0.0
  %754 = vmatprep.subr.mxu0 0.0
  %755 = vmatpush2.msra.mxu0 0.0
  %756 = vmatprep.subr.mxu0 0.0
  %757 = vmatpush2.msra.mxu0 0.0
  %758 = vmatprep.subr.mxu0 0.0
  %759 = vmatpush2.msra.mxu0 0.0
  %760 = vmatprep.mubr.f32.mxu0 0.0
  %761 = vmatmul.mubr.f32.gmra.mxu0 %v694
  %v762 = vpop.f32.mrf.mxu0
  %v763 = vadd.f32 0.0, %v762
  %v764 = vpop.f32.mrf.mxu0
  %v765 = vadd.f32 0.0, %v764
  %766 = vdwg.mxu0
  %v767 = vadd.f32 %v692, %v763
  %v768 = vadd.f32 %v693, %v765
  %v769 = vxor.u32 %v767, 2147483648
  %v770 = vxor.u32 %v768, 2147483648
  %v771 = vmul.f32 %v769, 1.442695
  %v772 = vpow.pop %v771
  %v773 = vmul.f32 %v770, 1.442695
  %v774 = vpow.pop %v773
  %v775 = vadd.f32 %v772, 1.0
  %v776 = vadd.f32 %v774, 1.0
  %v777 = vrcp.pop %v775
  %v778 = vmul.f32 1.0, %v777
  %v779 = vrcp.pop %v776
  %v780 = vmul.f32 1.0, %v779
  %v781 = vtanh.pop %v768
  %v782 = vmul.f32 %v778, %v679
  %784 = vrot.lane.b32.xlu0 %v781, 64
  %v785 = vpop.permute.xlu0 %784
  %v787 = vmul.f32 %v778, %v785
  %789 = vrot.lane.b32.xlu0 %v787, 64
  %v790 = vpop.permute.xlu0 %789
  %v792 = vadd.f32 %v782, %v790
  %v793 = vtanh.pop %v792
  %795 = vrot.lane.b32.xlu0 %v793, 64
  %v796 = vpop.permute.xlu0 %795
  %v798 = vmul.f32 %v780, %v796
  %799 = vst.msk [vmem:[#allocation3 + $0x20] sm:$0xff] %vm84, %v798
  %801 = vrot.lane.b32.xlu0 %v798, 64
  %v802 = vpop.permute.xlu0 %801
  %804 = vst.msk [vmem:[#allocation3 + $0x18] sm:$0xff] %vm351, %v802
  %v805 = vld [vmem:[#allocation2 + $0x50] sm:$0xff]
  %v806 = vld [vmem:[#allocation2 + $0x58] sm:$0xff]
  %v807 = vsel %vm84, %v798, 0
  %809 = vmatprep.subr.mxu0 0.0
  %810 = vmatpush1.msra.mxu0 0.0
  %811 = vmatprep.subr.mxu0 0.0
  %812 = vmatpush1.msra.mxu0 0.0
  %813 = vmatprep.subr.mxu0 0.0
  %814 = vmatpush1.msra.mxu0 0.0
  %815 = vmatprep.subr.mxu0 0.0
  %816 = vmatpush1.msra.mxu0 0.0
  %817 = vmatprep.subr.mxu0 0.0
  %818 = vmatpush1.msra.mxu0 0.0
  %819 = vmatprep.subr.mxu0 0.0
  %820 = vmatpush1.msra.mxu0 0.0
  %821 = vmatprep.subr.mxu0 0.0
  %822 = vmatpush1.msra.mxu0 0.0
  %823 = vmatprep.subr.mxu0 0.0
  %824 = vmatpush1.msra.mxu0 0.0
  %825 = vmatprep.subr.mxu0 %v63
  %826 = vmatpush1.msra.mxu0 %v62
  %827 = vmatprep.subr.mxu0 %v61
  %828 = vmatpush1.msra.mxu0 %v60
  %829 = vmatprep.subr.mxu0 %v59
  %830 = vmatpush1.msra.mxu0 %v58
  %831 = vmatprep.subr.mxu0 %v57
  %832 = vmatpush1.msra.mxu0 %v56
  %833 = vmatprep.subr.mxu0 %v55
  %834 = vmatpush1.msra.mxu0 %v54
  %835 = vmatprep.subr.mxu0 %v53
  %836 = vmatpush1.msra.mxu0 %v52
  %837 = vmatprep.subr.mxu0 %v51
  %838 = vmatpush1.msra.mxu0 %v50
  %839 = vmatprep.subr.mxu0 %v49
  %840 = vmatpush1.msra.mxu0 %v48
  %841 = vmatprep.subr.mxu0 0.0
  %842 = vmatpush2.msra.mxu0 0.0
  %843 = vmatprep.subr.mxu0 0.0
  %844 = vmatpush2.msra.mxu0 0.0
  %845 = vmatprep.subr.mxu0 0.0
  %846 = vmatpush2.msra.mxu0 0.0
  %847 = vmatprep.subr.mxu0 0.0
  %848 = vmatpush2.msra.mxu0 0.0
  %849 = vmatprep.subr.mxu0 0.0
  %850 = vmatpush2.msra.mxu0 0.0
  %851 = vmatprep.subr.mxu0 0.0
  %852 = vmatpush2.msra.mxu0 0.0
  %853 = vmatprep.subr.mxu0 0.0
  %854 = vmatpush2.msra.mxu0 0.0
  %855 = vmatprep.subr.mxu0 0.0
  %856 = vmatpush2.msra.mxu0 0.0
  %857 = vmatprep.subr.mxu0 0.0
  %858 = vmatpush2.msra.mxu0 0.0
  %859 = vmatprep.subr.mxu0 0.0
  %860 = vmatpush2.msra.mxu0 0.0
  %861 = vmatprep.subr.mxu0 0.0
  %862 = vmatpush2.msra.mxu0 0.0
  %863 = vmatprep.subr.mxu0 0.0
  %864 = vmatpush2.msra.mxu0 0.0
  %865 = vmatprep.subr.mxu0 0.0
  %866 = vmatpush2.msra.mxu0 0.0
  %867 = vmatprep.subr.mxu0 0.0
  %868 = vmatpush2.msra.mxu0 0.0
  %869 = vmatprep.subr.mxu0 0.0
  %870 = vmatpush2.msra.mxu0 0.0
  %871 = vmatprep.subr.mxu0 0.0
  %872 = vmatpush2.msra.mxu0 0.0
  %873 = vmatprep.mubr.f32.mxu0 0.0
  %874 = vmatmul.mubr.f32.gmra.mxu0 %v807
  %v875 = vpop.f32.mrf.mxu0
  %v876 = vadd.f32 0.0, %v875
  %v877 = vpop.f32.mrf.mxu0
  %v878 = vadd.f32 0.0, %v877
  %879 = vdwg.mxu0
  %v880 = vadd.f32 %v805, %v876
  %v881 = vadd.f32 %v806, %v878
  %v882 = vxor.u32 %v880, 2147483648
  %v883 = vxor.u32 %v881, 2147483648
  %v884 = vmul.f32 %v882, 1.442695
  %v885 = vpow.pop %v884
  %v886 = vmul.f32 %v883, 1.442695
  %v887 = vpow.pop %v886
  %v888 = vadd.f32 %v885, 1.0
  %v889 = vadd.f32 %v887, 1.0
  %v890 = vrcp.pop %v888
  %v891 = vmul.f32 1.0, %v890
  %v892 = vrcp.pop %v889
  %v893 = vmul.f32 1.0, %v892
  %v894 = vtanh.pop %v881
  %v895 = vmul.f32 %v891, %v792
  %897 = vrot.lane.b32.xlu0 %v894, 64
  %v898 = vpop.permute.xlu0 %897
  %v900 = vmul.f32 %v891, %v898
  %902 = vrot.lane.b32.xlu0 %v900, 64
  %v903 = vpop.permute.xlu0 %902
  %v905 = vadd.f32 %v895, %v903
  %v906 = vtanh.pop %v905
  %908 = vrot.lane.b32.xlu0 %v906, 64
  %v909 = vpop.permute.xlu0 %908
  %v911 = vmul.f32 %v893, %v909
  %912 = vst.msk [vmem:[#allocation3 + $0x28] sm:$0xff] %vm84, %v911
  %914 = vrot.lane.b32.xlu0 %v911, 64
  %v915 = vpop.permute.xlu0 %914
  %917 = vst.msk [vmem:[#allocation3 + $0x10] sm:$0xff] %vm351, %v915
  %v918 = vld [vmem:[#allocation2 + $0x60] sm:$0xff]
  %v919 = vld [vmem:[#allocation2 + $0x68] sm:$0xff]
  %v920 = vsel %vm84, %v911, 0
  %922 = vmatprep.subr.mxu0 0.0
  %923 = vmatpush1.msra.mxu0 0.0
  %924 = vmatprep.subr.mxu0 0.0
  %925 = vmatpush1.msra.mxu0 0.0
  %926 = vmatprep.subr.mxu0 0.0
  %927 = vmatpush1.msra.mxu0 0.0
  %928 = vmatprep.subr.mxu0 0.0
  %929 = vmatpush1.msra.mxu0 0.0
  %930 = vmatprep.subr.mxu0 0.0
  %931 = vmatpush1.msra.mxu0 0.0
  %932 = vmatprep.subr.mxu0 0.0
  %933 = vmatpush1.msra.mxu0 0.0
  %934 = vmatprep.subr.mxu0 0.0
  %935 = vmatpush1.msra.mxu0 0.0
  %936 = vmatprep.subr.mxu0 0.0
  %937 = vmatpush1.msra.mxu0 0.0
  %938 = vmatprep.subr.mxu0 %v63
  %939 = vmatpush1.msra.mxu0 %v62
  %940 = vmatprep.subr.mxu0 %v61
  %941 = vmatpush1.msra.mxu0 %v60
  %942 = vmatprep.subr.mxu0 %v59
  %943 = vmatpush1.msra.mxu0 %v58
  %944 = vmatprep.subr.mxu0 %v57
  %945 = vmatpush1.msra.mxu0 %v56
  %946 = vmatprep.subr.mxu0 %v55
  %947 = vmatpush1.msra.mxu0 %v54
  %948 = vmatprep.subr.mxu0 %v53
  %949 = vmatpush1.msra.mxu0 %v52
  %950 = vmatprep.subr.mxu0 %v51
  %951 = vmatpush1.msra.mxu0 %v50
  %952 = vmatprep.subr.mxu0 %v49
  %953 = vmatpush1.msra.mxu0 %v48
  %954 = vmatprep.subr.mxu0 0.0
  %955 = vmatpush2.msra.mxu0 0.0
  %956 = vmatprep.subr.mxu0 0.0
  %957 = vmatpush2.msra.mxu0 0.0
  %958 = vmatprep.subr.mxu0 0.0
  %959 = vmatpush2.msra.mxu0 0.0
  %960 = vmatprep.subr.mxu0 0.0
  %961 = vmatpush2.msra.mxu0 0.0
  %962 = vmatprep.subr.mxu0 0.0
  %963 = vmatpush2.msra.mxu0 0.0
  %964 = vmatprep.subr.mxu0 0.0
  %965 = vmatpush2.msra.mxu0 0.0
  %966 = vmatprep.subr.mxu0 0.0
  %967 = vmatpush2.msra.mxu0 0.0
  %968 = vmatprep.subr.mxu0 0.0
  %969 = vmatpush2.msra.mxu0 0.0
  %970 = vmatprep.subr.mxu0 0.0
  %971 = vmatpush2.msra.mxu0 0.0
  %972 = vmatprep.subr.mxu0 0.0
  %973 = vmatpush2.msra.mxu0 0.0
  %974 = vmatprep.subr.mxu0 0.0
  %975 = vmatpush2.msra.mxu0 0.0
  %976 = vmatprep.subr.mxu0 0.0
  %977 = vmatpush2.msra.mxu0 0.0
  %978 = vmatprep.subr.mxu0 0.0
  %979 = vmatpush2.msra.mxu0 0.0
  %980 = vmatprep.subr.mxu0 0.0
  %981 = vmatpush2.msra.mxu0 0.0
  %982 = vmatprep.subr.mxu0 0.0
  %983 = vmatpush2.msra.mxu0 0.0
  %984 = vmatprep.subr.mxu0 0.0
  %985 = vmatpush2.msra.mxu0 0.0
  %986 = vmatprep.mubr.f32.mxu0 0.0
  %987 = vmatmul.mubr.f32.gmra.mxu0 %v920
  %v988 = vpop.f32.mrf.mxu0
  %v989 = vadd.f32 0.0, %v988
  %v990 = vpop.f32.mrf.mxu0
  %v991 = vadd.f32 0.0, %v990
  %992 = vdwg.mxu0
  %v993 = vadd.f32 %v918, %v989
  %v994 = vadd.f32 %v919, %v991
  %v995 = vxor.u32 %v993, 2147483648
  %v996 = vxor.u32 %v994, 2147483648
  %v997 = vmul.f32 %v995, 1.442695
  %v998 = vpow.pop %v997
  %v999 = vmul.f32 %v996, 1.442695
  %v1000 = vpow.pop %v999
  %v1001 = vadd.f32 %v998, 1.0
  %v1002 = vadd.f32 %v1000, 1.0
  %v1003 = vrcp.pop %v1001
  %v1004 = vmul.f32 1.0, %v1003
  %v1005 = vrcp.pop %v1002
  %v1006 = vmul.f32 1.0, %v1005
  %v1007 = vtanh.pop %v994
  %v1008 = vmul.f32 %v1004, %v905
  %1010 = vrot.lane.b32.xlu0 %v1007, 64
  %v1011 = vpop.permute.xlu0 %1010
  %v1013 = vmul.f32 %v1004, %v1011
  %1015 = vrot.lane.b32.xlu0 %v1013, 64
  %v1016 = vpop.permute.xlu0 %1015
  %v1018 = vadd.f32 %v1008, %v1016
  %v1019 = vtanh.pop %v1018
  %1021 = vrot.lane.b32.xlu0 %v1019, 64
  %v1022 = vpop.permute.xlu0 %1021
  %v1024 = vmul.f32 %v1006, %v1022
  %1025 = vst.msk [vmem:[#allocation3 + $0x30] sm:$0xff] %vm84, %v1024
  %1027 = vrot.lane.b32.xlu0 %v1024, 64
  %v1028 = vpop.permute.xlu0 %1027
  %1030 = vst.msk [vmem:[#allocation3 + $0x8] sm:$0xff] %vm351, %v1028
  %v1031 = vld [vmem:[#allocation2 + $0x70] sm:$0xff]
  %v1032 = vld [vmem:[#allocation2 + $0x78] sm:$0xff]
  %v1033 = vsel %vm84, %v1024, 0
  %1035 = vmatprep.subr.mxu0 0.0
  %1036 = vmatpush1.msra.mxu0 0.0
  %1037 = vmatprep.subr.mxu0 0.0
  %1038 = vmatpush1.msra.mxu0 0.0
  %1039 = vmatprep.subr.mxu0 0.0
  %1040 = vmatpush1.msra.mxu0 0.0
  %1041 = vmatprep.subr.mxu0 0.0
  %1042 = vmatpush1.msra.mxu0 0.0
  %1043 = vmatprep.subr.mxu0 0.0
  %1044 = vmatpush1.msra.mxu0 0.0
  %1045 = vmatprep.subr.mxu0 0.0
  %1046 = vmatpush1.msra.mxu0 0.0
  %1047 = vmatprep.subr.mxu0 0.0
  %1048 = vmatpush1.msra.mxu0 0.0
  %1049 = vmatprep.subr.mxu0 0.0
  %1050 = vmatpush1.msra.mxu0 0.0
  %1051 = vmatprep.subr.mxu0 %v63
  %1052 = vmatpush1.msra.mxu0 %v62
  %1053 = vmatprep.subr.mxu0 %v61
  %1054 = vmatpush1.msra.mxu0 %v60
  %1055 = vmatprep.subr.mxu0 %v59
  %1056 = vmatpush1.msra.mxu0 %v58
  %1057 = vmatprep.subr.mxu0 %v57
  %1058 = vmatpush1.msra.mxu0 %v56
  %1059 = vmatprep.subr.mxu0 %v55
  %1060 = vmatpush1.msra.mxu0 %v54
  %1061 = vmatprep.subr.mxu0 %v53
  %1062 = vmatpush1.msra.mxu0 %v52
  %1063 = vmatprep.subr.mxu0 %v51
  %1064 = vmatpush1.msra.mxu0 %v50
  %1065 = vmatprep.subr.mxu0 %v49
  %1066 = vmatpush1.msra.mxu0 %v48
  %1067 = vmatprep.subr.mxu0 0.0
  %1068 = vmatpush2.msra.mxu0 0.0
  %1069 = vmatprep.subr.mxu0 0.0
  %1070 = vmatpush2.msra.mxu0 0.0
  %1071 = vmatprep.subr.mxu0 0.0
  %1072 = vmatpush2.msra.mxu0 0.0
  %1073 = vmatprep.subr.mxu0 0.0
  %1074 = vmatpush2.msra.mxu0 0.0
  %1075 = vmatprep.subr.mxu0 0.0
  %1076 = vmatpush2.msra.mxu0 0.0
  %1077 = vmatprep.subr.mxu0 0.0
  %1078 = vmatpush2.msra.mxu0 0.0
  %1079 = vmatprep.subr.mxu0 0.0
  %1080 = vmatpush2.msra.mxu0 0.0
  %1081 = vmatprep.subr.mxu0 0.0
  %1082 = vmatpush2.msra.mxu0 0.0
  %1083 = vmatprep.subr.mxu0 0.0
  %1084 = vmatpush2.msra.mxu0 0.0
  %1085 = vmatprep.subr.mxu0 0.0
  %1086 = vmatpush2.msra.mxu0 0.0
  %1087 = vmatprep.subr.mxu0 0.0
  %1088 = vmatpush2.msra.mxu0 0.0
  %1089 = vmatprep.subr.mxu0 0.0
  %1090 = vmatpush2.msra.mxu0 0.0
  %1091 = vmatprep.subr.mxu0 0.0
  %1092 = vmatpush2.msra.mxu0 0.0
  %1093 = vmatprep.subr.mxu0 0.0
  %1094 = vmatpush2.msra.mxu0 0.0
  %1095 = vmatprep.subr.mxu0 0.0
  %1096 = vmatpush2.msra.mxu0 0.0
  %1097 = vmatprep.subr.mxu0 0.0
  %1098 = vmatpush2.msra.mxu0 0.0
  %1099 = vmatprep.mubr.f32.mxu0 0.0
  %1100 = vmatmul.mubr.f32.gmra.mxu0 %v1033
  %v1101 = vpop.f32.mrf.mxu0
  %v1102 = vadd.f32 0.0, %v1101
  %v1103 = vpop.f32.mrf.mxu0
  %v1104 = vadd.f32 0.0, %v1103
  %1105 = vdwg.mxu0
  %v1106 = vadd.f32 %v1031, %v1102
  %v1107 = vadd.f32 %v1032, %v1104
  %v1108 = vxor.u32 %v1106, 2147483648
  %v1109 = vxor.u32 %v1107, 2147483648
  %v1110 = vmul.f32 %v1108, 1.442695
  %v1111 = vpow.pop %v1110
  %v1112 = vmul.f32 %v1109, 1.442695
  %v1113 = vpow.pop %v1112
  %v1114 = vadd.f32 %v1111, 1.0
  %v1115 = vadd.f32 %v1113, 1.0
  %v1116 = vrcp.pop %v1114
  %v1117 = vmul.f32 1.0, %v1116
  %v1118 = vrcp.pop %v1115
  %v1119 = vmul.f32 1.0, %v1118
  %v1120 = vtanh.pop %v1107
  %v1121 = vmul.f32 %v1117, %v1018
  %1123 = vrot.lane.b32.xlu0 %v1120, 64
  %v1124 = vpop.permute.xlu0 %1123
  %v1126 = vmul.f32 %v1117, %v1124
  %1128 = vrot.lane.b32.xlu0 %v1126, 64
  %v1129 = vpop.permute.xlu0 %1128
  %v1131 = vadd.f32 %v1121, %v1129
  %v1132 = vtanh.pop %v1131
  %1134 = vrot.lane.b32.xlu0 %v1132, 64
  %v1135 = vpop.permute.xlu0 %1134
  %v1137 = vmul.f32 %v1119, %v1135
  %1138 = vst.msk [vmem:[#allocation3 + $0x38] sm:$0xff] %vm84, %v1137
  %1140 = vrot.lane.b32.xlu0 %v1137, 64
  %v1141 = vpop.permute.xlu0 %1140
  %1143 = vst.msk [vmem:[#allocation3] sm:$0xff] %vm351, %v1141
  %v1144 = vld [vmem:[%s4] sm:$0xff]
  %v1145 = vld [vmem:[%s4 + $0x8] sm:$0xff]
  %v1146 = vld [vmem:[%s4 + $0x10] sm:$0xff]
  %v1147 = vld [vmem:[%s4 + $0x18] sm:$0xff]
  %v1148 = vld [vmem:[%s4 + $0x20] sm:$0xff]
  %v1149 = vld [vmem:[%s4 + $0x28] sm:$0xff]
  %v1150 = vld [vmem:[%s4 + $0x30] sm:$0xff]
  %v1151 = vld [vmem:[%s4 + $0x38] sm:$0xff]
  %v1152 = vld [vmem:[%s4 + $0x40] sm:$0xff]
  %v1153 = vld [vmem:[%s4 + $0x48] sm:$0xff]
  %v1154 = vld [vmem:[%s4 + $0x50] sm:$0xff]
  %v1155 = vld [vmem:[%s4 + $0x58] sm:$0xff]
  %v1156 = vld [vmem:[%s4 + $0x60] sm:$0xff]
  %v1157 = vld [vmem:[%s4 + $0x68] sm:$0xff]
  %v1158 = vld [vmem:[%s4 + $0x70] sm:$0xff]
  %v1159 = vld [vmem:[%s4 + $0x78] sm:$0xff]
  %v1160 = vld [vmem:[%s4 + $0x80] sm:$0xff]
  %v1161 = vld [vmem:[%s4 + $0x88] sm:$0xff]
  %v1162 = vld [vmem:[%s4 + $0x90] sm:$0xff]
  %v1163 = vld [vmem:[%s4 + $0x98] sm:$0xff]
  %v1164 = vld [vmem:[%s4 + $0xa0] sm:$0xff]
  %v1165 = vld [vmem:[%s4 + $0xa8] sm:$0xff]
  %v1166 = vld [vmem:[%s4 + $0xb0] sm:$0xff]
  %v1167 = vld [vmem:[%s4 + $0xb8] sm:$0xff]
  %v1168 = vld [vmem:[%s4 + $0xc0] sm:$0xff]
  %v1169 = vld [vmem:[%s4 + $0xc8] sm:$0xff]
  %v1170 = vld [vmem:[%s4 + $0xd0] sm:$0xff]
  %v1171 = vld [vmem:[%s4 + $0xd8] sm:$0xff]
  %v1172 = vld [vmem:[%s4 + $0xe0] sm:$0xff]
  %v1173 = vld [vmem:[%s4 + $0xe8] sm:$0xff]
  %v1174 = vld [vmem:[%s4 + $0xf0] sm:$0xff]
  %v1175 = vld [vmem:[%s4 + $0xf8] sm:$0xff]
  %v1176 = vld [vmem:[%s5] sm:$0xff]
  %v1177 = vld [vmem:[%s5 + $0x8] sm:$0xff]
  %v1178 = vld [vmem:[%s5 + $0x10] sm:$0xff]
  %v1179 = vld [vmem:[%s5 + $0x18] sm:$0xff]
  %v1180 = vld [vmem:[%s5 + $0x20] sm:$0xff]
  %v1181 = vld [vmem:[%s5 + $0x28] sm:$0xff]
  %v1182 = vld [vmem:[%s5 + $0x30] sm:$0xff]
  %v1183 = vld [vmem:[%s5 + $0x38] sm:$0xff]
  %v1184 = vld [vmem:[%s5 + $0x40] sm:$0xff]
  %v1185 = vld [vmem:[%s5 + $0x48] sm:$0xff]
  %v1186 = vld [vmem:[%s5 + $0x50] sm:$0xff]
  %v1187 = vld [vmem:[%s5 + $0x58] sm:$0xff]
  %v1188 = vld [vmem:[%s5 + $0x60] sm:$0xff]
  %v1189 = vld [vmem:[%s5 + $0x68] sm:$0xff]
  %v1190 = vld [vmem:[%s5 + $0x70] sm:$0xff]
  %v1191 = vld [vmem:[%s5 + $0x78] sm:$0xff]
  %v1192 = vld [vmem:[%s6] sm:$0x3]
  %v1193 = vld [vmem:[#allocation3] sm:$0xff]
  %v1194 = vld [vmem:[#allocation3 + $0x8] sm:$0xff]
  %v1195 = vld [vmem:[#allocation3 + $0x10] sm:$0xff]
  %v1196 = vld [vmem:[#allocation3 + $0x18] sm:$0xff]
  %v1197 = vld [vmem:[#allocation3 + $0x20] sm:$0xff]
  %v1198 = vld [vmem:[#allocation3 + $0x28] sm:$0xff]
  %v1199 = vld [vmem:[#allocation3 + $0x30] sm:$0xff]
  %v1200 = vld [vmem:[#allocation3 + $0x38] sm:$0xff]
  %v1202 = vlaneseq
  %v1203 = vshrl.u32 %v1202, 7
  %v1204 = vsub.s32 0, %v1203
  %v1205 = vrot.slane %v1192, %v1204
  %v1206 = vlaneseq
  %v1207 = vshrl.u32 %v1206, 7
  %v1208 = vsub.s32 1, %v1207
  %v1209 = vrot.slane %v1192, %v1208
  %1212 = vmatprep.subr.mxu0 %v1175
  %1213 = vmatpush1.msra.mxu0 %v1174
  %1214 = vmatprep.subr.mxu0 %v1173
  %1215 = vmatpush1.msra.mxu0 %v1172
  %1216 = vmatprep.subr.mxu0 %v1171
  %1217 = vmatpush1.msra.mxu0 %v1170
  %1218 = vmatprep.subr.mxu0 %v1169
  %1219 = vmatpush1.msra.mxu0 %v1168
  %1220 = vmatprep.subr.mxu0 %v1167
  %1221 = vmatpush1.msra.mxu0 %v1166
  %1222 = vmatprep.subr.mxu0 %v1165
  %1223 = vmatpush1.msra.mxu0 %v1164
  %1224 = vmatprep.subr.mxu0 %v1163
  %1225 = vmatpush1.msra.mxu0 %v1162
  %1226 = vmatprep.subr.mxu0 %v1161
  %1227 = vmatpush1.msra.mxu0 %v1160
  %1228 = vmatprep.subr.mxu0 %v1159
  %1229 = vmatpush1.msra.mxu0 %v1158
  %1230 = vmatprep.subr.mxu0 %v1157
  %1231 = vmatpush1.msra.mxu0 %v1156
  %1232 = vmatprep.subr.mxu0 %v1155
  %1233 = vmatpush1.msra.mxu0 %v1154
  %1234 = vmatprep.subr.mxu0 %v1153
  %1235 = vmatpush1.msra.mxu0 %v1152
  %1236 = vmatprep.subr.mxu0 %v1151
  %1237 = vmatpush1.msra.mxu0 %v1150
  %1238 = vmatprep.subr.mxu0 %v1149
  %1239 = vmatpush1.msra.mxu0 %v1148
  %1240 = vmatprep.subr.mxu0 %v1147
  %1241 = vmatpush1.msra.mxu0 %v1146
  %1242 = vmatprep.subr.mxu0 %v1145
  %1243 = vmatpush1.msra.mxu0 %v1144
  %1244 = vmatprep.subr.mxu0 0.0
  %1245 = vmatpush2.msra.mxu0 0.0
  %1246 = vmatprep.subr.mxu0 0.0
  %1247 = vmatpush2.msra.mxu0 0.0
  %1248 = vmatprep.subr.mxu0 0.0
  %1249 = vmatpush2.msra.mxu0 0.0
  %1250 = vmatprep.subr.mxu0 0.0
  %1251 = vmatpush2.msra.mxu0 0.0
  %1252 = vmatprep.subr.mxu0 0.0
  %1253 = vmatpush2.msra.mxu0 0.0
  %1254 = vmatprep.subr.mxu0 0.0
  %1255 = vmatpush2.msra.mxu0 0.0
  %1256 = vmatprep.subr.mxu0 0.0
  %1257 = vmatpush2.msra.mxu0 0.0
  %1258 = vmatprep.subr.mxu0 0.0
  %1259 = vmatpush2.msra.mxu0 0.0
  %1260 = vmatprep.subr.mxu0 0.0
  %1261 = vmatpush2.msra.mxu0 0.0
  %1262 = vmatprep.subr.mxu0 0.0
  %1263 = vmatpush2.msra.mxu0 0.0
  %1264 = vmatprep.subr.mxu0 0.0
  %1265 = vmatpush2.msra.mxu0 0.0
  %1266 = vmatprep.subr.mxu0 0.0
  %1267 = vmatpush2.msra.mxu0 0.0
  %1268 = vmatprep.subr.mxu0 0.0
  %1269 = vmatpush2.msra.mxu0 0.0
  %1270 = vmatprep.subr.mxu0 0.0
  %1271 = vmatpush2.msra.mxu0 0.0
  %1272 = vmatprep.subr.mxu0 0.0
  %1273 = vmatpush2.msra.mxu0 0.0
  %1274 = vmatprep.subr.mxu0 0.0
  %1275 = vmatpush2.msra.mxu0 0.0
  %1276 = vmatprep.mubr.f32.mxu0 0.0
  %1277 = vmatmul.mubr.f32.gmra.mxu0 %v1193
  %v1278 = vpop.f32.mrf.mxu0
  %v1279 = vadd.f32 %v1205, %v1278
  %v1280 = vpop.f32.mrf.mxu0
  %v1281 = vadd.f32 %v1209, %v1280
  %1282 = vmatprep.mubr.f32.mxu0 0.0
  %1283 = vmatmul.mubr.f32.gmra.mxu0 %v1194
  %v1284 = vpop.f32.mrf.mxu0
  %v1285 = vadd.f32 %v1205, %v1284
  %v1286 = vpop.f32.mrf.mxu0
  %v1287 = vadd.f32 %v1209, %v1286
  %1288 = vmatprep.mubr.f32.mxu0 0.0
  %1289 = vmatmul.mubr.f32.gmra.mxu0 %v1195
  %v1290 = vpop.f32.mrf.mxu0
  %v1291 = vadd.f32 %v1205, %v1290
  %v1292 = vpop.f32.mrf.mxu0
  %v1293 = vadd.f32 %v1209, %v1292
  %1294 = vmatprep.mubr.f32.mxu0 0.0
  %1295 = vmatmul.mubr.f32.gmra.mxu0 %v1196
  %v1296 = vpop.f32.mrf.mxu0
  %v1297 = vadd.f32 %v1205, %v1296
  %v1298 = vpop.f32.mrf.mxu0
  %v1299 = vadd.f32 %v1209, %v1298
  %1300 = vmatprep.mubr.f32.mxu0 0.0
  %1301 = vmatmul.mubr.f32.gmra.mxu0 %v1197
  %v1302 = vpop.f32.mrf.mxu0
  %v1303 = vadd.f32 %v1205, %v1302
  %v1304 = vpop.f32.mrf.mxu0
  %v1305 = vadd.f32 %v1209, %v1304
  %1306 = vmatprep.mubr.f32.mxu0 0.0
  %1307 = vmatmul.mubr.f32.gmra.mxu0 %v1198
  %v1308 = vpop.f32.mrf.mxu0
  %v1309 = vadd.f32 %v1205, %v1308
  %v1310 = vpop.f32.mrf.mxu0
  %v1311 = vadd.f32 %v1209, %v1310
  %1312 = vmatprep.mubr.f32.mxu0 0.0
  %1313 = vmatmul.mubr.f32.gmra.mxu0 %v1199
  %v1314 = vpop.f32.mrf.mxu0
  %v1315 = vadd.f32 %v1205, %v1314
  %v1316 = vpop.f32.mrf.mxu0
  %v1317 = vadd.f32 %v1209, %v1316
  %1318 = vmatprep.mubr.f32.mxu0 0.0
  %1319 = vmatmul.mubr.f32.gmra.mxu0 %v1200
  %v1320 = vpop.f32.mrf.mxu0
  %v1321 = vadd.f32 %v1205, %v1320
  %v1322 = vpop.f32.mrf.mxu0
  %v1323 = vadd.f32 %v1209, %v1322
  %1324 = vdwg.mxu0
  %1325 = vst [vmem:[#allocation2] sm:$0xff] %v1279
  %1326 = vst [vmem:[#allocation2 + $0x8] sm:$0xff] %v1281
  %1327 = vst [vmem:[#allocation2 + $0x10] sm:$0xff] %v1285
  %1328 = vst [vmem:[#allocation2 + $0x18] sm:$0xff] %v1287
  %1329 = vst [vmem:[#allocation2 + $0x20] sm:$0xff] %v1291
  %1330 = vst [vmem:[#allocation2 + $0x28] sm:$0xff] %v1293
  %1331 = vst [vmem:[#allocation2 + $0x30] sm:$0xff] %v1297
  %1332 = vst [vmem:[#allocation2 + $0x38] sm:$0xff] %v1299
  %1333 = vst [vmem:[#allocation2 + $0x40] sm:$0xff] %v1303
  %1334 = vst [vmem:[#allocation2 + $0x48] sm:$0xff] %v1305
  %1335 = vst [vmem:[#allocation2 + $0x50] sm:$0xff] %v1309
  %1336 = vst [vmem:[#allocation2 + $0x58] sm:$0xff] %v1311
  %1337 = vst [vmem:[#allocation2 + $0x60] sm:$0xff] %v1315
  %1338 = vst [vmem:[#allocation2 + $0x68] sm:$0xff] %v1317
  %1339 = vst [vmem:[#allocation2 + $0x70] sm:$0xff] %v1321
  %1340 = vst [vmem:[#allocation2 + $0x78] sm:$0xff] %v1323
  %v1341 = vld [vmem:[#allocation2] sm:$0xff]
  %v1342 = vld [vmem:[#allocation2 + $0x8] sm:$0xff]
  %1343 = vmatprep.subr.mxu0 0.0
  %1344 = vmatpush1.msra.mxu0 0.0
  %1345 = vmatprep.subr.mxu0 0.0
  %1346 = vmatpush1.msra.mxu0 0.0
  %1347 = vmatprep.subr.mxu0 0.0
  %1348 = vmatpush1.msra.mxu0 0.0
  %1349 = vmatprep.subr.mxu0 0.0
  %1350 = vmatpush1.msra.mxu0 0.0
  %1351 = vmatprep.subr.mxu0 0.0
  %1352 = vmatpush1.msra.mxu0 0.0
  %1353 = vmatprep.subr.mxu0 0.0
  %1354 = vmatpush1.msra.mxu0 0.0
  %1355 = vmatprep.subr.mxu0 0.0
  %1356 = vmatpush1.msra.mxu0 0.0
  %1357 = vmatprep.subr.mxu0 0.0
  %1358 = vmatpush1.msra.mxu0 0.0
  %1359 = vmatprep.subr.mxu0 %v1191
  %1360 = vmatpush1.msra.mxu0 %v1190
  %1361 = vmatprep.subr.mxu0 %v1189
  %1362 = vmatpush1.msra.mxu0 %v1188
  %1363 = vmatprep.subr.mxu0 %v1187
  %1364 = vmatpush1.msra.mxu0 %v1186
  %1365 = vmatprep.subr.mxu0 %v1185
  %1366 = vmatpush1.msra.mxu0 %v1184
  %1367 = vmatprep.subr.mxu0 %v1183
  %1368 = vmatpush1.msra.mxu0 %v1182
  %1369 = vmatprep.subr.mxu0 %v1181
  %1370 = vmatpush1.msra.mxu0 %v1180
  %1371 = vmatprep.subr.mxu0 %v1179
  %1372 = vmatpush1.msra.mxu0 %v1178
  %1373 = vmatprep.subr.mxu0 %v1177
  %1374 = vmatpush1.msra.mxu0 %v1176
  %1375 = vmatprep.subr.mxu0 0.0
  %1376 = vmatpush2.msra.mxu0 0.0
  %1377 = vmatprep.subr.mxu0 0.0
  %1378 = vmatpush2.msra.mxu0 0.0
  %1379 = vmatprep.subr.mxu0 0.0
  %1380 = vmatpush2.msra.mxu0 0.0
  %1381 = vmatprep.subr.mxu0 0.0
  %1382 = vmatpush2.msra.mxu0 0.0
  %1383 = vmatprep.subr.mxu0 0.0
  %1384 = vmatpush2.msra.mxu0 0.0
  %1385 = vmatprep.subr.mxu0 0.0
  %1386 = vmatpush2.msra.mxu0 0.0
  %1387 = vmatprep.subr.mxu0 0.0
  %1388 = vmatpush2.msra.mxu0 0.0
  %1389 = vmatprep.subr.mxu0 0.0
  %1390 = vmatpush2.msra.mxu0 0.0
  %1391 = vmatprep.subr.mxu0 0.0
  %1392 = vmatpush2.msra.mxu0 0.0
  %1393 = vmatprep.subr.mxu0 0.0
  %1394 = vmatpush2.msra.mxu0 0.0
  %1395 = vmatprep.subr.mxu0 0.0
  %1396 = vmatpush2.msra.mxu0 0.0
  %1397 = vmatprep.subr.mxu0 0.0
  %1398 = vmatpush2.msra.mxu0 0.0
  %1399 = vmatprep.subr.mxu0 0.0
  %1400 = vmatpush2.msra.mxu0 0.0
  %1401 = vmatprep.subr.mxu0 0.0
  %1402 = vmatpush2.msra.mxu0 0.0
  %1403 = vmatprep.subr.mxu0 0.0
  %1404 = vmatpush2.msra.mxu0 0.0
  %1405 = vmatprep.subr.mxu0 0.0
  %1406 = vmatpush2.msra.mxu0 0.0
  %1407 = vmatprep.mubr.f32.mxu0 0.0
  %1408 = vmatmul.mubr.f32.gmra.mxu0 %v241
  %v1409 = vpop.f32.mrf.mxu0
  %v1410 = vadd.f32 0.0, %v1409
  %v1411 = vpop.f32.mrf.mxu0
  %v1412 = vadd.f32 0.0, %v1411
  %1413 = vdwg.mxu0
  %v1414 = vadd.f32 %v1341, %v1410
  %v1415 = vadd.f32 %v1342, %v1412
  %v1416 = vxor.u32 %v1414, 2147483648
  %v1417 = vxor.u32 %v1415, 2147483648
  %v1418 = vmul.f32 %v1416, 1.442695
  %v1419 = vpow.pop %v1418
  %v1420 = vmul.f32 %v1417, 1.442695
  %v1421 = vpow.pop %v1420
  %v1422 = vadd.f32 %v1419, 1.0
  %v1423 = vadd.f32 %v1421, 1.0
  %v1424 = vrcp.pop %v1422
  %v1425 = vmul.f32 1.0, %v1424
  %v1426 = vrcp.pop %v1423
  %v1427 = vmul.f32 1.0, %v1426
  %v1428 = vtanh.pop %v1415
  %v1429 = vmul.f32 %v1425, 0.0
  %1431 = vrot.lane.b32.xlu0 %v1428, 64
  %v1432 = vpop.permute.xlu0 %1431
  %v1434 = vmul.f32 %v1425, %v1432
  %1436 = vrot.lane.b32.xlu0 %v1434, 64
  %v1437 = vpop.permute.xlu0 %1436
  %v1439 = vadd.f32 %v1429, %v1437
  %v1440 = vtanh.pop %v1439
  %1442 = vrot.lane.b32.xlu0 %v1440, 64
  %v1443 = vpop.permute.xlu0 %1442
  %v1445 = vmul.f32 %v1427, %v1443
  %v1446 = vld [vmem:[#allocation2 + $0x10] sm:$0xff]
  %v1447 = vld [vmem:[#allocation2 + $0x18] sm:$0xff]
  %v1449 = vsel %vm84, %v1445, 0
  %1451 = vmatprep.subr.mxu0 0.0
  %1452 = vmatpush1.msra.mxu0 0.0
  %1453 = vmatprep.subr.mxu0 0.0
  %1454 = vmatpush1.msra.mxu0 0.0
  %1455 = vmatprep.subr.mxu0 0.0
  %1456 = vmatpush1.msra.mxu0 0.0
  %1457 = vmatprep.subr.mxu0 0.0
  %1458 = vmatpush1.msra.mxu0 0.0
  %1459 = vmatprep.subr.mxu0 0.0
  %1460 = vmatpush1.msra.mxu0 0.0
  %1461 = vmatprep.subr.mxu0 0.0
  %1462 = vmatpush1.msra.mxu0 0.0
  %1463 = vmatprep.subr.mxu0 0.0
  %1464 = vmatpush1.msra.mxu0 0.0
  %1465 = vmatprep.subr.mxu0 0.0
  %1466 = vmatpush1.msra.mxu0 0.0
  %1467 = vmatprep.subr.mxu0 %v1191
  %1468 = vmatpush1.msra.mxu0 %v1190
  %1469 = vmatprep.subr.mxu0 %v1189
  %1470 = vmatpush1.msra.mxu0 %v1188
  %1471 = vmatprep.subr.mxu0 %v1187
  %1472 = vmatpush1.msra.mxu0 %v1186
  %1473 = vmatprep.subr.mxu0 %v1185
  %1474 = vmatpush1.msra.mxu0 %v1184
  %1475 = vmatprep.subr.mxu0 %v1183
  %1476 = vmatpush1.msra.mxu0 %v1182
  %1477 = vmatprep.subr.mxu0 %v1181
  %1478 = vmatpush1.msra.mxu0 %v1180
  %1479 = vmatprep.subr.mxu0 %v1179
  %1480 = vmatpush1.msra.mxu0 %v1178
  %1481 = vmatprep.subr.mxu0 %v1177
  %1482 = vmatpush1.msra.mxu0 %v1176
  %1483 = vmatprep.subr.mxu0 0.0
  %1484 = vmatpush2.msra.mxu0 0.0
  %1485 = vmatprep.subr.mxu0 0.0
  %1486 = vmatpush2.msra.mxu0 0.0
  %1487 = vmatprep.subr.mxu0 0.0
  %1488 = vmatpush2.msra.mxu0 0.0
  %1489 = vmatprep.subr.mxu0 0.0
  %1490 = vmatpush2.msra.mxu0 0.0
  %1491 = vmatprep.subr.mxu0 0.0
  %1492 = vmatpush2.msra.mxu0 0.0
  %1493 = vmatprep.subr.mxu0 0.0
  %1494 = vmatpush2.msra.mxu0 0.0
  %1495 = vmatprep.subr.mxu0 0.0
  %1496 = vmatpush2.msra.mxu0 0.0
  %1497 = vmatprep.subr.mxu0 0.0
  %1498 = vmatpush2.msra.mxu0 0.0
  %1499 = vmatprep.subr.mxu0 0.0
  %1500 = vmatpush2.msra.mxu0 0.0
  %1501 = vmatprep.subr.mxu0 0.0
  %1502 = vmatpush2.msra.mxu0 0.0
  %1503 = vmatprep.subr.mxu0 0.0
  %1504 = vmatpush2.msra.mxu0 0.0
  %1505 = vmatprep.subr.mxu0 0.0
  %1506 = vmatpush2.msra.mxu0 0.0
  %1507 = vmatprep.subr.mxu0 0.0
  %1508 = vmatpush2.msra.mxu0 0.0
  %1509 = vmatprep.subr.mxu0 0.0
  %1510 = vmatpush2.msra.mxu0 0.0
  %1511 = vmatprep.subr.mxu0 0.0
  %1512 = vmatpush2.msra.mxu0 0.0
  %1513 = vmatprep.subr.mxu0 0.0
  %1514 = vmatpush2.msra.mxu0 0.0
  %1515 = vmatprep.mubr.f32.mxu0 0.0
  %1516 = vmatmul.mubr.f32.gmra.mxu0 %v1449
  %v1517 = vpop.f32.mrf.mxu0
  %v1518 = vadd.f32 0.0, %v1517
  %v1519 = vpop.f32.mrf.mxu0
  %v1520 = vadd.f32 0.0, %v1519
  %1521 = vdwg.mxu0
  %v1522 = vadd.f32 %v1446, %v1518
  %v1523 = vadd.f32 %v1447, %v1520
  %v1524 = vxor.u32 %v1522, 2147483648
  %v1525 = vxor.u32 %v1523, 2147483648
  %v1526 = vmul.f32 %v1524, 1.442695
  %v1527 = vpow.pop %v1526
  %v1528 = vmul.f32 %v1525, 1.442695
  %v1529 = vpow.pop %v1528
  %v1530 = vadd.f32 %v1527, 1.0
  %v1531 = vadd.f32 %v1529, 1.0
  %v1532 = vrcp.pop %v1530
  %v1533 = vmul.f32 1.0, %v1532
  %v1534 = vrcp.pop %v1531
  %v1535 = vmul.f32 1.0, %v1534
  %v1536 = vtanh.pop %v1523
  %v1537 = vmul.f32 %v1533, %v1439
  %1539 = vrot.lane.b32.xlu0 %v1536, 64
  %v1540 = vpop.permute.xlu0 %1539
  %v1542 = vmul.f32 %v1533, %v1540
  %1544 = vrot.lane.b32.xlu0 %v1542, 64
  %v1545 = vpop.permute.xlu0 %1544
  %v1547 = vadd.f32 %v1537, %v1545
  %v1548 = vtanh.pop %v1547
  %1550 = vrot.lane.b32.xlu0 %v1548, 64
  %v1551 = vpop.permute.xlu0 %1550
  %v1553 = vmul.f32 %v1535, %v1551
  %v1554 = vld [vmem:[#allocation2 + $0x20] sm:$0xff]
  %v1555 = vld [vmem:[#allocation2 + $0x28] sm:$0xff]
  %v1557 = vsel %vm84, %v1553, 0
  %1559 = vmatprep.subr.mxu0 0.0
  %1560 = vmatpush1.msra.mxu0 0.0
  %1561 = vmatprep.subr.mxu0 0.0
  %1562 = vmatpush1.msra.mxu0 0.0
  %1563 = vmatprep.subr.mxu0 0.0
  %1564 = vmatpush1.msra.mxu0 0.0
  %1565 = vmatprep.subr.mxu0 0.0
  %1566 = vmatpush1.msra.mxu0 0.0
  %1567 = vmatprep.subr.mxu0 0.0
  %1568 = vmatpush1.msra.mxu0 0.0
  %1569 = vmatprep.subr.mxu0 0.0
  %1570 = vmatpush1.msra.mxu0 0.0
  %1571 = vmatprep.subr.mxu0 0.0
  %1572 = vmatpush1.msra.mxu0 0.0
  %1573 = vmatprep.subr.mxu0 0.0
  %1574 = vmatpush1.msra.mxu0 0.0
  %1575 = vmatprep.subr.mxu0 %v1191
  %1576 = vmatpush1.msra.mxu0 %v1190
  %1577 = vmatprep.subr.mxu0 %v1189
  %1578 = vmatpush1.msra.mxu0 %v1188
  %1579 = vmatprep.subr.mxu0 %v1187
  %1580 = vmatpush1.msra.mxu0 %v1186
  %1581 = vmatprep.subr.mxu0 %v1185
  %1582 = vmatpush1.msra.mxu0 %v1184
  %1583 = vmatprep.subr.mxu0 %v1183
  %1584 = vmatpush1.msra.mxu0 %v1182
  %1585 = vmatprep.subr.mxu0 %v1181
  %1586 = vmatpush1.msra.mxu0 %v1180
  %1587 = vmatprep.subr.mxu0 %v1179
  %1588 = vmatpush1.msra.mxu0 %v1178
  %1589 = vmatprep.subr.mxu0 %v1177
  %1590 = vmatpush1.msra.mxu0 %v1176
  %1591 = vmatprep.subr.mxu0 0.0
  %1592 = vmatpush2.msra.mxu0 0.0
  %1593 = vmatprep.subr.mxu0 0.0
  %1594 = vmatpush2.msra.mxu0 0.0
  %1595 = vmatprep.subr.mxu0 0.0
  %1596 = vmatpush2.msra.mxu0 0.0
  %1597 = vmatprep.subr.mxu0 0.0
  %1598 = vmatpush2.msra.mxu0 0.0
  %1599 = vmatprep.subr.mxu0 0.0
  %1600 = vmatpush2.msra.mxu0 0.0
  %1601 = vmatprep.subr.mxu0 0.0
  %1602 = vmatpush2.msra.mxu0 0.0
  %1603 = vmatprep.subr.mxu0 0.0
  %1604 = vmatpush2.msra.mxu0 0.0
  %1605 = vmatprep.subr.mxu0 0.0
  %1606 = vmatpush2.msra.mxu0 0.0
  %1607 = vmatprep.subr.mxu0 0.0
  %1608 = vmatpush2.msra.mxu0 0.0
  %1609 = vmatprep.subr.mxu0 0.0
  %1610 = vmatpush2.msra.mxu0 0.0
  %1611 = vmatprep.subr.mxu0 0.0
  %1612 = vmatpush2.msra.mxu0 0.0
  %1613 = vmatprep.subr.mxu0 0.0
  %1614 = vmatpush2.msra.mxu0 0.0
  %1615 = vmatprep.subr.mxu0 0.0
  %1616 = vmatpush2.msra.mxu0 0.0
  %1617 = vmatprep.subr.mxu0 0.0
  %1618 = vmatpush2.msra.mxu0 0.0
  %1619 = vmatprep.subr.mxu0 0.0
  %1620 = vmatpush2.msra.mxu0 0.0
  %1621 = vmatprep.subr.mxu0 0.0
  %1622 = vmatpush2.msra.mxu0 0.0
  %1623 = vmatprep.mubr.f32.mxu0 0.0
  %1624 = vmatmul.mubr.f32.gmra.mxu0 %v1557
  %v1625 = vpop.f32.mrf.mxu0
  %v1626 = vadd.f32 0.0, %v1625
  %v1627 = vpop.f32.mrf.mxu0
  %v1628 = vadd.f32 0.0, %v1627
  %1629 = vdwg.mxu0
  %v1630 = vadd.f32 %v1554, %v1626
  %v1631 = vadd.f32 %v1555, %v1628
  %v1632 = vxor.u32 %v1630, 2147483648
  %v1633 = vxor.u32 %v1631, 2147483648
  %v1634 = vmul.f32 %v1632, 1.442695
  %v1635 = vpow.pop %v1634
  %v1636 = vmul.f32 %v1633, 1.442695
  %v1637 = vpow.pop %v1636
  %v1638 = vadd.f32 %v1635, 1.0
  %v1639 = vadd.f32 %v1637, 1.0
  %v1640 = vrcp.pop %v1638
  %v1641 = vmul.f32 1.0, %v1640
  %v1642 = vrcp.pop %v1639
  %v1643 = vmul.f32 1.0, %v1642
  %v1644 = vtanh.pop %v1631
  %v1645 = vmul.f32 %v1641, %v1547
  %1647 = vrot.lane.b32.xlu0 %v1644, 64
  %v1648 = vpop.permute.xlu0 %1647
  %v1650 = vmul.f32 %v1641, %v1648
  %1652 = vrot.lane.b32.xlu0 %v1650, 64
  %v1653 = vpop.permute.xlu0 %1652
  %v1655 = vadd.f32 %v1645, %v1653
  %v1656 = vtanh.pop %v1655
  %1658 = vrot.lane.b32.xlu0 %v1656, 64
  %v1659 = vpop.permute.xlu0 %1658
  %v1661 = vmul.f32 %v1643, %v1659
  %v1662 = vld [vmem:[#allocation2 + $0x30] sm:$0xff]
  %v1663 = vld [vmem:[#allocation2 + $0x38] sm:$0xff]
  %v1665 = vsel %vm84, %v1661, 0
  %1667 = vmatprep.subr.mxu0 0.0
  %1668 = vmatpush1.msra.mxu0 0.0
  %1669 = vmatprep.subr.mxu0 0.0
  %1670 = vmatpush1.msra.mxu0 0.0
  %1671 = vmatprep.subr.mxu0 0.0
  %1672 = vmatpush1.msra.mxu0 0.0
  %1673 = vmatprep.subr.mxu0 0.0
  %1674 = vmatpush1.msra.mxu0 0.0
  %1675 = vmatprep.subr.mxu0 0.0
  %1676 = vmatpush1.msra.mxu0 0.0
  %1677 = vmatprep.subr.mxu0 0.0
  %1678 = vmatpush1.msra.mxu0 0.0
  %1679 = vmatprep.subr.mxu0 0.0
  %1680 = vmatpush1.msra.mxu0 0.0
  %1681 = vmatprep.subr.mxu0 0.0
  %1682 = vmatpush1.msra.mxu0 0.0
  %1683 = vmatprep.subr.mxu0 %v1191
  %1684 = vmatpush1.msra.mxu0 %v1190
  %1685 = vmatprep.subr.mxu0 %v1189
  %1686 = vmatpush1.msra.mxu0 %v1188
  %1687 = vmatprep.subr.mxu0 %v1187
  %1688 = vmatpush1.msra.mxu0 %v1186
  %1689 = vmatprep.subr.mxu0 %v1185
  %1690 = vmatpush1.msra.mxu0 %v1184
  %1691 = vmatprep.subr.mxu0 %v1183
  %1692 = vmatpush1.msra.mxu0 %v1182
  %1693 = vmatprep.subr.mxu0 %v1181
  %1694 = vmatpush1.msra.mxu0 %v1180
  %1695 = vmatprep.subr.mxu0 %v1179
  %1696 = vmatpush1.msra.mxu0 %v1178
  %1697 = vmatprep.subr.mxu0 %v1177
  %1698 = vmatpush1.msra.mxu0 %v1176
  %1699 = vmatprep.subr.mxu0 0.0
  %1700 = vmatpush2.msra.mxu0 0.0
  %1701 = vmatprep.subr.mxu0 0.0
  %1702 = vmatpush2.msra.mxu0 0.0
  %1703 = vmatprep.subr.mxu0 0.0
  %1704 = vmatpush2.msra.mxu0 0.0
  %1705 = vmatprep.subr.mxu0 0.0
  %1706 = vmatpush2.msra.mxu0 0.0
  %1707 = vmatprep.subr.mxu0 0.0
  %1708 = vmatpush2.msra.mxu0 0.0
  %1709 = vmatprep.subr.mxu0 0.0
  %1710 = vmatpush2.msra.mxu0 0.0
  %1711 = vmatprep.subr.mxu0 0.0
  %1712 = vmatpush2.msra.mxu0 0.0
  %1713 = vmatprep.subr.mxu0 0.0
  %1714 = vmatpush2.msra.mxu0 0.0
  %1715 = vmatprep.subr.mxu0 0.0
  %1716 = vmatpush2.msra.mxu0 0.0
  %1717 = vmatprep.subr.mxu0 0.0
  %1718 = vmatpush2.msra.mxu0 0.0
  %1719 = vmatprep.subr.mxu0 0.0
  %1720 = vmatpush2.msra.mxu0 0.0
  %1721 = vmatprep.subr.mxu0 0.0
  %1722 = vmatpush2.msra.mxu0 0.0
  %1723 = vmatprep.subr.mxu0 0.0
  %1724 = vmatpush2.msra.mxu0 0.0
  %1725 = vmatprep.subr.mxu0 0.0
  %1726 = vmatpush2.msra.mxu0 0.0
  %1727 = vmatprep.subr.mxu0 0.0
  %1728 = vmatpush2.msra.mxu0 0.0
  %1729 = vmatprep.subr.mxu0 0.0
  %1730 = vmatpush2.msra.mxu0 0.0
  %1731 = vmatprep.mubr.f32.mxu0 0.0
  %1732 = vmatmul.mubr.f32.gmra.mxu0 %v1665
  %v1733 = vpop.f32.mrf.mxu0
  %v1734 = vadd.f32 0.0, %v1733
  %v1735 = vpop.f32.mrf.mxu0
  %v1736 = vadd.f32 0.0, %v1735
  %1737 = vdwg.mxu0
  %v1738 = vadd.f32 %v1662, %v1734
  %v1739 = vadd.f32 %v1663, %v1736
  %v1740 = vxor.u32 %v1738, 2147483648
  %v1741 = vxor.u32 %v1739, 2147483648
  %v1742 = vmul.f32 %v1740, 1.442695
  %v1743 = vpow.pop %v1742
  %v1744 = vmul.f32 %v1741, 1.442695
  %v1745 = vpow.pop %v1744
  %v1746 = vadd.f32 %v1743, 1.0
  %v1747 = vadd.f32 %v1745, 1.0
  %v1748 = vrcp.pop %v1746
  %v1749 = vmul.f32 1.0, %v1748
  %v1750 = vrcp.pop %v1747
  %v1751 = vmul.f32 1.0, %v1750
  %v1752 = vtanh.pop %v1739
  %v1753 = vmul.f32 %v1749, %v1655
  %1755 = vrot.lane.b32.xlu0 %v1752, 64
  %v1756 = vpop.permute.xlu0 %1755
  %v1758 = vmul.f32 %v1749, %v1756
  %1760 = vrot.lane.b32.xlu0 %v1758, 64
  %v1761 = vpop.permute.xlu0 %1760
  %v1763 = vadd.f32 %v1753, %v1761
  %v1764 = vtanh.pop %v1763
  %1766 = vrot.lane.b32.xlu0 %v1764, 64
  %v1767 = vpop.permute.xlu0 %1766
  %v1769 = vmul.f32 %v1751, %v1767
  %v1770 = vld [vmem:[#allocation2 + $0x40] sm:$0xff]
  %v1771 = vld [vmem:[#allocation2 + $0x48] sm:$0xff]
  %v1773 = vsel %vm84, %v1769, 0
  %1775 = vmatprep.subr.mxu0 0.0
  %1776 = vmatpush1.msra.mxu0 0.0
  %1777 = vmatprep.subr.mxu0 0.0
  %1778 = vmatpush1.msra.mxu0 0.0
  %1779 = vmatprep.subr.mxu0 0.0
  %1780 = vmatpush1.msra.mxu0 0.0
  %1781 = vmatprep.subr.mxu0 0.0
  %1782 = vmatpush1.msra.mxu0 0.0
  %1783 = vmatprep.subr.mxu0 0.0
  %1784 = vmatpush1.msra.mxu0 0.0
  %1785 = vmatprep.subr.mxu0 0.0
  %1786 = vmatpush1.msra.mxu0 0.0
  %1787 = vmatprep.subr.mxu0 0.0
  %1788 = vmatpush1.msra.mxu0 0.0
  %1789 = vmatprep.subr.mxu0 0.0
  %1790 = vmatpush1.msra.mxu0 0.0
  %1791 = vmatprep.subr.mxu0 %v1191
  %1792 = vmatpush1.msra.mxu0 %v1190
  %1793 = vmatprep.subr.mxu0 %v1189
  %1794 = vmatpush1.msra.mxu0 %v1188
  %1795 = vmatprep.subr.mxu0 %v1187
  %1796 = vmatpush1.msra.mxu0 %v1186
  %1797 = vmatprep.subr.mxu0 %v1185
  %1798 = vmatpush1.msra.mxu0 %v1184
  %1799 = vmatprep.subr.mxu0 %v1183
  %1800 = vmatpush1.msra.mxu0 %v1182
  %1801 = vmatprep.subr.mxu0 %v1181
  %1802 = vmatpush1.msra.mxu0 %v1180
  %1803 = vmatprep.subr.mxu0 %v1179
  %1804 = vmatpush1.msra.mxu0 %v1178
  %1805 = vmatprep.subr.mxu0 %v1177
  %1806 = vmatpush1.msra.mxu0 %v1176
  %1807 = vmatprep.subr.mxu0 0.0
  %1808 = vmatpush2.msra.mxu0 0.0
  %1809 = vmatprep.subr.mxu0 0.0
  %1810 = vmatpush2.msra.mxu0 0.0
  %1811 = vmatprep.subr.mxu0 0.0
  %1812 = vmatpush2.msra.mxu0 0.0
  %1813 = vmatprep.subr.mxu0 0.0
  %1814 = vmatpush2.msra.mxu0 0.0
  %1815 = vmatprep.subr.mxu0 0.0
  %1816 = vmatpush2.msra.mxu0 0.0
  %1817 = vmatprep.subr.mxu0 0.0
  %1818 = vmatpush2.msra.mxu0 0.0
  %1819 = vmatprep.subr.mxu0 0.0
  %1820 = vmatpush2.msra.mxu0 0.0
  %1821 = vmatprep.subr.mxu0 0.0
  %1822 = vmatpush2.msra.mxu0 0.0
  %1823 = vmatprep.subr.mxu0 0.0
  %1824 = vmatpush2.msra.mxu0 0.0
  %1825 = vmatprep.subr.mxu0 0.0
  %1826 = vmatpush2.msra.mxu0 0.0
  %1827 = vmatprep.subr.mxu0 0.0
  %1828 = vmatpush2.msra.mxu0 0.0
  %1829 = vmatprep.subr.mxu0 0.0
  %1830 = vmatpush2.msra.mxu0 0.0
  %1831 = vmatprep.subr.mxu0 0.0
  %1832 = vmatpush2.msra.mxu0 0.0
  %1833 = vmatprep.subr.mxu0 0.0
  %1834 = vmatpush2.msra.mxu0 0.0
  %1835 = vmatprep.subr.mxu0 0.0
  %1836 = vmatpush2.msra.mxu0 0.0
  %1837 = vmatprep.subr.mxu0 0.0
  %1838 = vmatpush2.msra.mxu0 0.0
  %1839 = vmatprep.mubr.f32.mxu0 0.0
  %1840 = vmatmul.mubr.f32.gmra.mxu0 %v1773
  %v1841 = vpop.f32.mrf.mxu0
  %v1842 = vadd.f32 0.0, %v1841
  %v1843 = vpop.f32.mrf.mxu0
  %v1844 = vadd.f32 0.0, %v1843
  %1845 = vdwg.mxu0
  %v1846 = vadd.f32 %v1770, %v1842
  %v1847 = vadd.f32 %v1771, %v1844
  %v1848 = vxor.u32 %v1846, 2147483648
  %v1849 = vxor.u32 %v1847, 2147483648
  %v1850 = vmul.f32 %v1848, 1.442695
  %v1851 = vpow.pop %v1850
  %v1852 = vmul.f32 %v1849, 1.442695
  %v1853 = vpow.pop %v1852
  %v1854 = vadd.f32 %v1851, 1.0
  %v1855 = vadd.f32 %v1853, 1.0
  %v1856 = vrcp.pop %v1854
  %v1857 = vmul.f32 1.0, %v1856
  %v1858 = vrcp.pop %v1855
  %v1859 = vmul.f32 1.0, %v1858
  %v1860 = vtanh.pop %v1847
  %v1861 = vmul.f32 %v1857, %v1763
  %1863 = vrot.lane.b32.xlu0 %v1860, 64
  %v1864 = vpop.permute.xlu0 %1863
  %v1866 = vmul.f32 %v1857, %v1864
  %1868 = vrot.lane.b32.xlu0 %v1866, 64
  %v1869 = vpop.permute.xlu0 %1868
  %v1871 = vadd.f32 %v1861, %v1869
  %v1872 = vtanh.pop %v1871
  %1874 = vrot.lane.b32.xlu0 %v1872, 64
  %v1875 = vpop.permute.xlu0 %1874
  %v1877 = vmul.f32 %v1859, %v1875
  %v1878 = vld [vmem:[#allocation2 + $0x50] sm:$0xff]
  %v1879 = vld [vmem:[#allocation2 + $0x58] sm:$0xff]
  %v1881 = vsel %vm84, %v1877, 0
  %1883 = vmatprep.subr.mxu0 0.0
  %1884 = vmatpush1.msra.mxu0 0.0
  %1885 = vmatprep.subr.mxu0 0.0
  %1886 = vmatpush1.msra.mxu0 0.0
  %1887 = vmatprep.subr.mxu0 0.0
  %1888 = vmatpush1.msra.mxu0 0.0
  %1889 = vmatprep.subr.mxu0 0.0
  %1890 = vmatpush1.msra.mxu0 0.0
  %1891 = vmatprep.subr.mxu0 0.0
  %1892 = vmatpush1.msra.mxu0 0.0
  %1893 = vmatprep.subr.mxu0 0.0
  %1894 = vmatpush1.msra.mxu0 0.0
  %1895 = vmatprep.subr.mxu0 0.0
  %1896 = vmatpush1.msra.mxu0 0.0
  %1897 = vmatprep.subr.mxu0 0.0
  %1898 = vmatpush1.msra.mxu0 0.0
  %1899 = vmatprep.subr.mxu0 %v1191
  %1900 = vmatpush1.msra.mxu0 %v1190
  %1901 = vmatprep.subr.mxu0 %v1189
  %1902 = vmatpush1.msra.mxu0 %v1188
  %1903 = vmatprep.subr.mxu0 %v1187
  %1904 = vmatpush1.msra.mxu0 %v1186
  %1905 = vmatprep.subr.mxu0 %v1185
  %1906 = vmatpush1.msra.mxu0 %v1184
  %1907 = vmatprep.subr.mxu0 %v1183
  %1908 = vmatpush1.msra.mxu0 %v1182
  %1909 = vmatprep.subr.mxu0 %v1181
  %1910 = vmatpush1.msra.mxu0 %v1180
  %1911 = vmatprep.subr.mxu0 %v1179
  %1912 = vmatpush1.msra.mxu0 %v1178
  %1913 = vmatprep.subr.mxu0 %v1177
  %1914 = vmatpush1.msra.mxu0 %v1176
  %1915 = vmatprep.subr.mxu0 0.0
  %1916 = vmatpush2.msra.mxu0 0.0
  %1917 = vmatprep.subr.mxu0 0.0
  %1918 = vmatpush2.msra.mxu0 0.0
  %1919 = vmatprep.subr.mxu0 0.0
  %1920 = vmatpush2.msra.mxu0 0.0
  %1921 = vmatprep.subr.mxu0 0.0
  %1922 = vmatpush2.msra.mxu0 0.0
  %1923 = vmatprep.subr.mxu0 0.0
  %1924 = vmatpush2.msra.mxu0 0.0
  %1925 = vmatprep.subr.mxu0 0.0
  %1926 = vmatpush2.msra.mxu0 0.0
  %1927 = vmatprep.subr.mxu0 0.0
  %1928 = vmatpush2.msra.mxu0 0.0
  %1929 = vmatprep.subr.mxu0 0.0
  %1930 = vmatpush2.msra.mxu0 0.0
  %1931 = vmatprep.subr.mxu0 0.0
  %1932 = vmatpush2.msra.mxu0 0.0
  %1933 = vmatprep.subr.mxu0 0.0
  %1934 = vmatpush2.msra.mxu0 0.0
  %1935 = vmatprep.subr.mxu0 0.0
  %1936 = vmatpush2.msra.mxu0 0.0
  %1937 = vmatprep.subr.mxu0 0.0
  %1938 = vmatpush2.msra.mxu0 0.0
  %1939 = vmatprep.subr.mxu0 0.0
  %1940 = vmatpush2.msra.mxu0 0.0
  %1941 = vmatprep.subr.mxu0 0.0
  %1942 = vmatpush2.msra.mxu0 0.0
  %1943 = vmatprep.subr.mxu0 0.0
  %1944 = vmatpush2.msra.mxu0 0.0
  %1945 = vmatprep.subr.mxu0 0.0
  %1946 = vmatpush2.msra.mxu0 0.0
  %1947 = vmatprep.mubr.f32.mxu0 0.0
  %1948 = vmatmul.mubr.f32.gmra.mxu0 %v1881
  %v1949 = vpop.f32.mrf.mxu0
  %v1950 = vadd.f32 0.0, %v1949
  %v1951 = vpop.f32.mrf.mxu0
  %v1952 = vadd.f32 0.0, %v1951
  %1953 = vdwg.mxu0
  %v1954 = vadd.f32 %v1878, %v1950
  %v1955 = vadd.f32 %v1879, %v1952
  %v1956 = vxor.u32 %v1954, 2147483648
  %v1957 = vxor.u32 %v1955, 2147483648
  %v1958 = vmul.f32 %v1956, 1.442695
  %v1959 = vpow.pop %v1958
  %v1960 = vmul.f32 %v1957, 1.442695
  %v1961 = vpow.pop %v1960
  %v1962 = vadd.f32 %v1959, 1.0
  %v1963 = vadd.f32 %v1961, 1.0
  %v1964 = vrcp.pop %v1962
  %v1965 = vmul.f32 1.0, %v1964
  %v1966 = vrcp.pop %v1963
  %v1967 = vmul.f32 1.0, %v1966
  %v1968 = vtanh.pop %v1955
  %v1969 = vmul.f32 %v1965, %v1871
  %1971 = vrot.lane.b32.xlu0 %v1968, 64
  %v1972 = vpop.permute.xlu0 %1971
  %v1974 = vmul.f32 %v1965, %v1972
  %1976 = vrot.lane.b32.xlu0 %v1974, 64
  %v1977 = vpop.permute.xlu0 %1976
  %v1979 = vadd.f32 %v1969, %v1977
  %v1980 = vtanh.pop %v1979
  %1982 = vrot.lane.b32.xlu0 %v1980, 64
  %v1983 = vpop.permute.xlu0 %1982
  %v1985 = vmul.f32 %v1967, %v1983
  %v1986 = vld [vmem:[#allocation2 + $0x60] sm:$0xff]
  %v1987 = vld [vmem:[#allocation2 + $0x68] sm:$0xff]
  %v1989 = vsel %vm84, %v1985, 0
  %1991 = vmatprep.subr.mxu0 0.0
  %1992 = vmatpush1.msra.mxu0 0.0
  %1993 = vmatprep.subr.mxu0 0.0
  %1994 = vmatpush1.msra.mxu0 0.0
  %1995 = vmatprep.subr.mxu0 0.0
  %1996 = vmatpush1.msra.mxu0 0.0
  %1997 = vmatprep.subr.mxu0 0.0
  %1998 = vmatpush1.msra.mxu0 0.0
  %1999 = vmatprep.subr.mxu0 0.0
  %2000 = vmatpush1.msra.mxu0 0.0
  %2001 = vmatprep.subr.mxu0 0.0
  %2002 = vmatpush1.msra.mxu0 0.0
  %2003 = vmatprep.subr.mxu0 0.0
  %2004 = vmatpush1.msra.mxu0 0.0
  %2005 = vmatprep.subr.mxu0 0.0
  %2006 = vmatpush1.msra.mxu0 0.0
  %2007 = vmatprep.subr.mxu0 %v1191
  %2008 = vmatpush1.msra.mxu0 %v1190
  %2009 = vmatprep.subr.mxu0 %v1189
  %2010 = vmatpush1.msra.mxu0 %v1188
  %2011 = vmatprep.subr.mxu0 %v1187
  %2012 = vmatpush1.msra.mxu0 %v1186
  %2013 = vmatprep.subr.mxu0 %v1185
  %2014 = vmatpush1.msra.mxu0 %v1184
  %2015 = vmatprep.subr.mxu0 %v1183
  %2016 = vmatpush1.msra.mxu0 %v1182
  %2017 = vmatprep.subr.mxu0 %v1181
  %2018 = vmatpush1.msra.mxu0 %v1180
  %2019 = vmatprep.subr.mxu0 %v1179
  %2020 = vmatpush1.msra.mxu0 %v1178
  %2021 = vmatprep.subr.mxu0 %v1177
  %2022 = vmatpush1.msra.mxu0 %v1176
  %2023 = vmatprep.subr.mxu0 0.0
  %2024 = vmatpush2.msra.mxu0 0.0
  %2025 = vmatprep.subr.mxu0 0.0
  %2026 = vmatpush2.msra.mxu0 0.0
  %2027 = vmatprep.subr.mxu0 0.0
  %2028 = vmatpush2.msra.mxu0 0.0
  %2029 = vmatprep.subr.mxu0 0.0
  %2030 = vmatpush2.msra.mxu0 0.0
  %2031 = vmatprep.subr.mxu0 0.0
  %2032 = vmatpush2.msra.mxu0 0.0
  %2033 = vmatprep.subr.mxu0 0.0
  %2034 = vmatpush2.msra.mxu0 0.0
  %2035 = vmatprep.subr.mxu0 0.0
  %2036 = vmatpush2.msra.mxu0 0.0
  %2037 = vmatprep.subr.mxu0 0.0
  %2038 = vmatpush2.msra.mxu0 0.0
  %2039 = vmatprep.subr.mxu0 0.0
  %2040 = vmatpush2.msra.mxu0 0.0
  %2041 = vmatprep.subr.mxu0 0.0
  %2042 = vmatpush2.msra.mxu0 0.0
  %2043 = vmatprep.subr.mxu0 0.0
  %2044 = vmatpush2.msra.mxu0 0.0
  %2045 = vmatprep.subr.mxu0 0.0
  %2046 = vmatpush2.msra.mxu0 0.0
  %2047 = vmatprep.subr.mxu0 0.0
  %2048 = vmatpush2.msra.mxu0 0.0
  %2049 = vmatprep.subr.mxu0 0.0
  %2050 = vmatpush2.msra.mxu0 0.0
  %2051 = vmatprep.subr.mxu0 0.0
  %2052 = vmatpush2.msra.mxu0 0.0
  %2053 = vmatprep.subr.mxu0 0.0
  %2054 = vmatpush2.msra.mxu0 0.0
  %2055 = vmatprep.mubr.f32.mxu0 0.0
  %2056 = vmatmul.mubr.f32.gmra.mxu0 %v1989
  %v2057 = vpop.f32.mrf.mxu0
  %v2058 = vadd.f32 0.0, %v2057
  %v2059 = vpop.f32.mrf.mxu0
  %v2060 = vadd.f32 0.0, %v2059
  %2061 = vdwg.mxu0
  %v2062 = vadd.f32 %v1986, %v2058
  %v2063 = vadd.f32 %v1987, %v2060
  %v2064 = vxor.u32 %v2062, 2147483648
  %v2065 = vxor.u32 %v2063, 2147483648
  %v2066 = vmul.f32 %v2064, 1.442695
  %v2067 = vpow.pop %v2066
  %v2068 = vmul.f32 %v2065, 1.442695
  %v2069 = vpow.pop %v2068
  %v2070 = vadd.f32 %v2067, 1.0
  %v2071 = vadd.f32 %v2069, 1.0
  %v2072 = vrcp.pop %v2070
  %v2073 = vmul.f32 1.0, %v2072
  %v2074 = vrcp.pop %v2071
  %v2075 = vmul.f32 1.0, %v2074
  %v2076 = vtanh.pop %v2063
  %v2077 = vmul.f32 %v2073, %v1979
  %2079 = vrot.lane.b32.xlu0 %v2076, 64
  %v2080 = vpop.permute.xlu0 %2079
  %v2082 = vmul.f32 %v2073, %v2080
  %2084 = vrot.lane.b32.xlu0 %v2082, 64
  %v2085 = vpop.permute.xlu0 %2084
  %v2087 = vadd.f32 %v2077, %v2085
  %v2088 = vtanh.pop %v2087
  %2090 = vrot.lane.b32.xlu0 %v2088, 64
  %v2091 = vpop.permute.xlu0 %2090
  %v2093 = vmul.f32 %v2075, %v2091
  %v2094 = vld [vmem:[#allocation2 + $0x70] sm:$0xff]
  %v2095 = vld [vmem:[#allocation2 + $0x78] sm:$0xff]
  %v2097 = vsel %vm84, %v2093, 0
  %2099 = vmatprep.subr.mxu0 0.0
  %2100 = vmatpush1.msra.mxu0 0.0
  %2101 = vmatprep.subr.mxu0 0.0
  %2102 = vmatpush1.msra.mxu0 0.0
  %2103 = vmatprep.subr.mxu0 0.0
  %2104 = vmatpush1.msra.mxu0 0.0
  %2105 = vmatprep.subr.mxu0 0.0
  %2106 = vmatpush1.msra.mxu0 0.0
  %2107 = vmatprep.subr.mxu0 0.0
  %2108 = vmatpush1.msra.mxu0 0.0
  %2109 = vmatprep.subr.mxu0 0.0
  %2110 = vmatpush1.msra.mxu0 0.0
  %2111 = vmatprep.subr.mxu0 0.0
  %2112 = vmatpush1.msra.mxu0 0.0
  %2113 = vmatprep.subr.mxu0 0.0
  %2114 = vmatpush1.msra.mxu0 0.0
  %2115 = vmatprep.subr.mxu0 %v1191
  %2116 = vmatpush1.msra.mxu0 %v1190
  %2117 = vmatprep.subr.mxu0 %v1189
  %2118 = vmatpush1.msra.mxu0 %v1188
  %2119 = vmatprep.subr.mxu0 %v1187
  %2120 = vmatpush1.msra.mxu0 %v1186
  %2121 = vmatprep.subr.mxu0 %v1185
  %2122 = vmatpush1.msra.mxu0 %v1184
  %2123 = vmatprep.subr.mxu0 %v1183
  %2124 = vmatpush1.msra.mxu0 %v1182
  %2125 = vmatprep.subr.mxu0 %v1181
  %2126 = vmatpush1.msra.mxu0 %v1180
  %2127 = vmatprep.subr.mxu0 %v1179
  %2128 = vmatpush1.msra.mxu0 %v1178
  %2129 = vmatprep.subr.mxu0 %v1177
  %2130 = vmatpush1.msra.mxu0 %v1176
  %2131 = vmatprep.subr.mxu0 0.0
  %2132 = vmatpush2.msra.mxu0 0.0
  %2133 = vmatprep.subr.mxu0 0.0
  %2134 = vmatpush2.msra.mxu0 0.0
  %2135 = vmatprep.subr.mxu0 0.0
  %2136 = vmatpush2.msra.mxu0 0.0
  %2137 = vmatprep.subr.mxu0 0.0
  %2138 = vmatpush2.msra.mxu0 0.0
  %2139 = vmatprep.subr.mxu0 0.0
  %2140 = vmatpush2.msra.mxu0 0.0
  %2141 = vmatprep.subr.mxu0 0.0
  %2142 = vmatpush2.msra.mxu0 0.0
  %2143 = vmatprep.subr.mxu0 0.0
  %2144 = vmatpush2.msra.mxu0 0.0
  %2145 = vmatprep.subr.mxu0 0.0
  %2146 = vmatpush2.msra.mxu0 0.0
  %2147 = vmatprep.subr.mxu0 0.0
  %2148 = vmatpush2.msra.mxu0 0.0
  %2149 = vmatprep.subr.mxu0 0.0
  %2150 = vmatpush2.msra.mxu0 0.0
  %2151 = vmatprep.subr.mxu0 0.0
  %2152 = vmatpush2.msra.mxu0 0.0
  %2153 = vmatprep.subr.mxu0 0.0
  %2154 = vmatpush2.msra.mxu0 0.0
  %2155 = vmatprep.subr.mxu0 0.0
  %2156 = vmatpush2.msra.mxu0 0.0
  %2157 = vmatprep.subr.mxu0 0.0
  %2158 = vmatpush2.msra.mxu0 0.0
  %2159 = vmatprep.subr.mxu0 0.0
  %2160 = vmatpush2.msra.mxu0 0.0
  %2161 = vmatprep.subr.mxu0 0.0
  %2162 = vmatpush2.msra.mxu0 0.0
  %2163 = vmatprep.mubr.f32.mxu0 0.0
  %2164 = vmatmul.mubr.f32.gmra.mxu0 %v2097
  %v2165 = vpop.f32.mrf.mxu0
  %v2166 = vadd.f32 0.0, %v2165
  %v2167 = vpop.f32.mrf.mxu0
  %v2168 = vadd.f32 0.0, %v2167
  %2169 = vdwg.mxu0
  %v2170 = vadd.f32 %v2094, %v2166
  %v2171 = vadd.f32 %v2095, %v2168
  %v2172 = vxor.u32 %v2170, 2147483648
  %v2173 = vxor.u32 %v2171, 2147483648
  %v2174 = vmul.f32 %v2172, 1.442695
  %v2175 = vpow.pop %v2174
  %v2176 = vmul.f32 %v2173, 1.442695
  %v2177 = vpow.pop %v2176
  %v2178 = vadd.f32 %v2175, 1.0
  %v2179 = vadd.f32 %v2177, 1.0
  %v2180 = vrcp.pop %v2178
  %v2181 = vmul.f32 1.0, %v2180
  %v2182 = vrcp.pop %v2179
  %v2183 = vmul.f32 1.0, %v2182
  %v2184 = vtanh.pop %v2171
  %v2185 = vmul.f32 %v2181, %v2087
  %2187 = vrot.lane.b32.xlu0 %v2184, 64
  %v2188 = vpop.permute.xlu0 %2187
  %v2190 = vmul.f32 %v2181, %v2188
  %2192 = vrot.lane.b32.xlu0 %v2190, 64
  %v2193 = vpop.permute.xlu0 %2192
  %v2195 = vadd.f32 %v2185, %v2193
  %v2196 = vtanh.pop %v2195
  %2198 = vrot.lane.b32.xlu0 %v2196, 64
  %v2199 = vpop.permute.xlu0 %2198
  %v2201 = vmul.f32 %v2183, %v2199
  %v2203 = vrot.slane %v2201, 2
  %v2205 = vmul.f32 %v2201, %v2203
  %2207 = vrot.lane.b32.xlu0 %v2205, 96
  %v2208 = vpop.permute.xlu0 %2207
  %vm2210 = vcmask 254976
  %v2211 = vsel %vm2210, %v2208, 0.0
  %2212 = vadd.xlane.f32.xlu0 %v2211
  %v2213 = vpop.xlane.xlu0 %2212
  %v2214 = vmul.f32 %v2201, %v2201
  %2216 = vrot.lane.b32.xlu0 %v2214, 96
  %v2217 = vpop.permute.xlu0 %2216
  %v2219 = vsel %vm2210, %v2217, 0.0
  %2220 = vadd.xlane.f32.xlu0 %v2219
  %v2221 = vpop.xlane.xlu0 %2220
  %v2222 = vrsqrt.pop %v2221
  %v2223 = vmul.f32 %v2221, %v2222
  %vm2224 = vcmp.eq.f32.partialorder %v2221, inf
  %v2225 = vsel %vm2224, %v2221, %v2223
  %vm2226 = vcmp.eq.f32.partialorder %v2221, 0.0
  %v2227 = vand.u32 %v2221, 2147483648
  %v2228 = vsel %vm2226, %v2227, %v2225
  %vm2229 = vcmask 257026
  %v2230 = vsel %vm2229, %v2217, 0.0
  %2231 = vadd.xlane.f32.xlu0 %v2230
  %v2232 = vpop.xlane.xlu0 %2231
  %v2233 = vrsqrt.pop %v2232
  %v2234 = vmul.f32 %v2232, %v2233
  %vm2235 = vcmp.eq.f32.partialorder %v2232, inf
  %v2236 = vsel %vm2235, %v2232, %v2234
  %vm2237 = vcmp.eq.f32.partialorder %v2232, 0.0
  %v2238 = vand.u32 %v2232, 2147483648
  %v2239 = vsel %vm2237, %v2238, %v2236
  %v2241 = vrot.slane %v2239, 2
  %v2243 = vmul.f32 %v2228, %v2241
  %v2244 = vmax.f32 %v2243, 1e-06
  %v2245 = vrcp.pop %v2244
  %v2246 = vmul.f32 %v2213, %v2245
  %v2247 = vand.u32 2147483647, %v2246
  %v2248 = vsub.f32 %v2201, %v2203
  %v2249 = vand.u32 2147483647, %v2248
  %2251 = vrot.lane.b32.xlu0 %v2249, 96
  %v2252 = vpop.permute.xlu0 %2251
  %v2254 = vsel %vm2210, %v2252, 0.0
  %2255 = vadd.xlane.f32.xlu0 %v2254
  %v2256 = vpop.xlane.xlu0 %2255
  %v2257 = vsub.f32 0.0, %v2256
  %v2258 = vmul.f32 %v2257, 1.442695
  %v2259 = vpow.pop %v2258
  %v2260 = vld [vmem:[%s7] sm:$0x3]
  %2262 = vset.pattern.permute.xlu0 0
  %2263 = vperm.xlu0 %2262, %v2247
  %v2264 = vpop.permute.xlu0 %2263
  %v2266 = vlaneseq
  %v2267 = vshrl.u32 %v2266, 7
  %v2268 = vsub.s32 0, %v2267
  %v2269 = vrot.slane %v2260, %v2268
  %v2270 = vmul.f32 %v2264, %v2269
  %v2271 = vlaneseq
  %v2272 = vshrl.u32 %v2271, 7
  %v2273 = vsub.s32 1, %v2272
  %v2274 = vrot.slane %v2260, %v2273
  %v2275 = vmul.f32 %v2259, %v2274
  %v2276 = vadd.f32 %v2270, %v2275
  %v2277 = vld [vmem:[%s8] sm:$0x1]
  %v2279 = vlaneseq
  %v2280 = vshrl.u32 %v2279, 7
  %v2281 = vsub.s32 0, %v2280
  %v2282 = vrot.slane %v2277, %v2281
  %v2284 = vadd.f32 %v2276, %v2282
  %vm2285 = vcmask 9216
  %v2286 = vsel %vm2285, %v2284, -inf
  %2287 = vmax.xlane.f32.xlu0 %v2286
  %v2288 = vpop.xlane.xlu0 %2287
  %v2289 = vsub.f32 %v2284, %v2288
  %v2290 = vmul.f32 %v2289, 1.442695
  %v2291 = vpow.pop %v2290
  %v2292 = vsel %vm2285, %v2291, 0.0
  %2293 = vadd.xlane.f32.xlu0 %v2292
  %v2294 = vpop.xlane.xlu0 %2293
  %v2295 = vrcp.pop %v2294
  %v2296 = vmul.f32 %v2291, %v2295
  %2297 = vst [vmem:[%s9] sm:$0xff] 0.0
  %2298 = vst.msk [vmem:[%s9] sm:$0x3] %vm2285, %v2296
  // Predicated region
  $region38: #{siamese_lstm_forward.1} parent=0 // pred_check
    _
  $region39: #{siamese_lstm_forward.1} parent=0 // pred_check_branch
    %2300 = sbr.rel (0) target = $region41
  $region40: #{siamese_lstm_forward.1} parent=0 // pred_region
    _
  $region41: #{siamese_lstm_forward.1} parent=0 // pred_fallthru
    _
  // Predicated region
  $region42: #{siamese_lstm_forward.1} parent=0 // pred_check
    _
  $region43: #{siamese_lstm_forward.1} parent=0 // pred_check_branch
    %2302 = sbr.rel (0) target = $region45
  $region44: #{siamese_lstm_forward.1} parent=0 // pred_region
    _
  $region45: #{siamese_lstm_forward.1} parent=0 // pred_fallthru
    _

</llo_original>
